<compile_context>
chip_gen: v6e
topology: v6e:2x2x1
jax: 0.10.0
libtpu: 0.0.40
codegen_flags: <defaults>
</compile_context>

<pallas_src>
import jax
import jax.numpy as jnp
from jax import lax
from jax.experimental import pallas as pl
from jax.experimental.pallas import tpu as pltpu


_ROW_GROUP = 8  # vertices produced per sublane-dense d store


def _make_mrconv_kernel(*, n_tile, k_nbrs, c_in, fuse_cat, center_is_identity):
    """Builds the per-(batch, N-tile) kernel body; all shape params are static."""

    def kernel(ej_ref, ei_ref,   # (NT*K,) int32 per-tile neighbor / center indices (SMEM)
               x_ref,            # (N_pad, C)    per-batch features, VMEM resident across ni
               w_ref,            # (Cout, 2C)    1x1-conv weight
               b_ref,            # (Cout, 1)     bias
               o_ref,            # (Cout, NT)    output tile (NCW layout, lane-dense on N)
               d_ref):           # (NT, 2C) if fuse_cat else (NT, C)  scratch
        ni = pl.program_id(1)
        row0 = pl.multiple_of(ni * n_tile, n_tile)          # tile start within padded N
        d_col0 = c_in if fuse_cat else 0

        def row(idx):            # (1, C) gather of one vertex from the resident x block
            return x_ref[pl.ds(idx, 1), :]

        x_tile = x_ref[pl.ds(row0, n_tile), :]              # (NT, C) center features

        if fuse_cat:             # cat[:, :C] = x  (single 2C-deep MXU pass later)
            d_ref[:, pl.ds(0, c_in)] = x_tile

        def group_body(g, carry):
            r0 = pl.multiple_of(g * _ROW_GROUP, _ROW_GROUP)
            rows = []
            for r in range(_ROW_GROUP):                     # static unroll: 8 indep. chains
                base = (r0 + r) * k_nbrs
                if center_is_identity:                      # d = max_k(x_j) - x_center
                    acc = row(ej_ref[base])
                    for k in range(1, k_nbrs):
                        acc = jnp.maximum(acc, row(ej_ref[base + k]))
                else:                                       # general: d = max_k(x_j - x_i)
                    acc = row(ej_ref[base]) - row(ei_ref[base])
                    for k in range(1, k_nbrs):
                        acc = jnp.maximum(
                            acc, row(ej_ref[base + k]) - row(ei_ref[base + k]))
                rows.append(acc)
            block = jnp.concatenate(rows, axis=0)           # (8, C)
            if center_is_identity:
                block = block - x_ref[pl.ds(row0 + r0, _ROW_GROUP), :]
            # one sublane-dense (8, C) store instead of 8 masked single-row stores
            d_ref[pl.ds(r0, _ROW_GROUP), pl.ds(d_col0, c_in)] = block
            return carry

        lax.fori_loop(0, n_tile // _ROW_GROUP, group_body, 0)

        # 1x1 conv over channels + bias + ReLU -> (Cout, NT) lane-dense tile.
        if fuse_cat:
            y = jnp.einsum('oc,nc->on', w_ref[...], d_ref[...],
                           preferred_element_type=jnp.float32)
        else:
            y = jnp.einsum('oc,nc->on', w_ref[:, pl.ds(0, c_in)], x_tile,
                           preferred_element_type=jnp.float32)
            y = y + jnp.einsum('oc,nc->on', w_ref[:, pl.ds(c_in, c_in)], d_ref[...],
                               preferred_element_type=jnp.float32)
        y = jnp.maximum(y + b_ref[...], 0.0)                # bias (Cout,1) lane broadcast
        o_ref[...] = y.astype(o_ref.dtype)

    return kernel


def _pick_n_tile(n_pad):
    for cand in (512, 256, 128):
        if n_pad % cand == 0:
            return cand
    return n_pad  # unreachable: n_pad is always a multiple of 128


def graph_conv2d(x, edge_index, w, b, *,
                 center_is_identity=False, compute_dtype=jnp.float32):
    """MRConv1d / GraphConv2d forward.

    x: (B, C, N) f32; edge_index: (2, B, N, K) int; w: (Cout, 2C); b: (Cout,).
    Returns (B, Cout, N) = relu(conv1x1(cat([x, max_k(x_j - x_i)], channel))).
    """
    B, C, N = x.shape
    K = edge_index.shape[-1]
    Cout = w.shape[0]

    # Pad N to a multiple of 128: unmasked lane-dense output stores, bounded
    # per-step VMEM working set. Padded columns are sliced off at the end.
    n_pad = pl.cdiv(N, 128) * 128
    nt = _pick_n_tile(n_pad)
    n_tiles = n_pad // nt

    x_nwc = jnp.transpose(x, (0, 2, 1)).astype(compute_dtype)     # (B, N, C)
    if n_pad != N:
        x_nwc = jnp.pad(x_nwc, ((0, 0), (0, n_pad - N), (0, 0)))

    # Clamp (VMEM row gathers have no runtime OOB check) and split indices into
    # per-(batch, N-tile) blocks -- delivered per grid step via SMEM BlockSpec.
    idx = jnp.clip(edge_index.astype(jnp.int32), 0, N - 1)
    if n_pad != N:
        idx = jnp.pad(idx, ((0, 0), (0, 0), (0, n_pad - N), (0, 0)))
    ej = idx[0].reshape(B, n_tiles, nt * K)
    ei = idx[1].reshape(B, n_tiles, nt * K)

    w2 = w.astype(compute_dtype)                                  # (Cout, 2C)
    b2 = b.reshape(Cout, 1).astype(jnp.float32)

    fuse_cat = (2 * C) <= 256             # single 2C-deep MXU pass for small C
    d_cols = 2 * C if fuse_cat else C

    kernel = _make_mrconv_kernel(n_tile=nt, k_nbrs=K, c_in=C,
                                 fuse_cat=fuse_cat,
                                 center_is_identity=center_is_identity)

    # Explicit VMEM budget (v5e default scoped limit is 16 MiB; v7x has 64 MiB).
    elt = jnp.dtype(compute_dtype).itemsize
    vmem_need = (2 * n_pad * C * elt              # double-buffered per-batch x
                 + 2 * Cout * nt * 4              # double-buffered output tile
                 + nt * d_cols * elt              # scratch
                 + 2 * (2 * C * Cout * elt + Cout * 4))
    vmem_limit = int(min(max(2 * vmem_need, 32 * 2 ** 20), 64 * 2 ** 20))

    # Megacore: split over batches (not N-tiles) when possible so two cores
    # never re-DMA the same resident per-batch x block (v7x).
    dims = ("parallel", "arbitrary") if B >= 2 else ("parallel", "parallel")

    flops = 2 * B * n_pad * (2 * C) * Cout
    bytes_accessed = int(x_nwc.size * elt + (w2.size + b2.size) * elt
                         + (ej.size + ei.size) * 4 + B * Cout * n_pad * 4)

    out = pl.pallas_call(
        kernel,
        out_shape=jax.ShapeDtypeStruct((B, Cout, n_pad), x.dtype),
        grid=(B, n_tiles),
        in_specs=[
            pl.BlockSpec((None, None, nt * K), lambda bi, ni: (bi, ni, 0),
                         memory_space=pltpu.MemorySpace.SMEM),
            pl.BlockSpec((None, None, nt * K), lambda bi, ni: (bi, ni, 0),
                         memory_space=pltpu.MemorySpace.SMEM),
            # full per-batch x stays in VMEM across all N-tiles of a batch
            pl.BlockSpec((None, n_pad, C), lambda bi, ni: (bi, 0, 0)),
            pl.BlockSpec((Cout, 2 * C), lambda bi, ni: (0, 0)),
            pl.BlockSpec((Cout, 1), lambda bi, ni: (0, 0)),
        ],
        out_specs=pl.BlockSpec((None, Cout, nt), lambda bi, ni: (bi, 0, ni)),
        scratch_shapes=[pltpu.VMEM((nt, d_cols), compute_dtype)],
        compiler_params=pltpu.CompilerParams(
            dimension_semantics=dims, vmem_limit_bytes=vmem_limit),
        cost_estimate=pl.CostEstimate(flops=flops, transcendentals=0,
                                      bytes_accessed=bytes_accessed),
    )(ej, ei, x_nwc, w2, b2)

    return out[:, :, :N] if n_pad != N else out


def ref_forward(x, edge_index, w, b):
    """Pure-JAX reference mirroring the PyTorch module."""
    gat = jax.vmap(lambda xb, idx: xb[:, idx])                 # (C,N),(N,K) -> (C,N,K)
    xj = gat(x, edge_index[0])                                 # (B, C, N, K)
    xi = gat(x, edge_index[1])                                 # (B, C, N, K)
    d = jnp.max(xj - xi, axis=-1)                              # (B, C, N)
    cat = jnp.concatenate([x, d], axis=1)                      # (B, 2C, N)
    y = jnp.einsum('oc,bcn->bon', w, cat) + b[None, :, None]
    return jnp.maximum(y, 0.0)


if __name__ == "__main__":
    B, C, N, K, Cout = 2, 4, 16, 8, 8

    key = jax.random.PRNGKey(0)
    kx, ke, kw, kb = jax.random.split(key, 4)

    x = jax.random.normal(kx, (B, C, N), jnp.float32)
    edge_index = jax.random.randint(ke, (2, B, N, K), 0, N, jnp.int32)

    # Conv1d(2C -> Cout, kernel=1, bias=True) parameters.
    w = jax.random.normal(kw, (Cout, 2 * C), jnp.float32) * 0.1
    b = jax.random.normal(kb, (Cout,), jnp.float32) * 0.1

    out = jax.block_until_ready(graph_conv2d(x, edge_index, w, b))
    ref = ref_forward(x, edge_index, w, b)

    assert out.shape == (B, Cout, N), out.shape
    assert jnp.allclose(out, ref, rtol=1e-5, atol=1e-5), "mismatch vs reference"

    print("KERNEL_OK")
</pallas_src>

<mosaic_0001>
module attributes {stable_mosaic.version = 11 : i64} {
  func.func @kernel(%arg0: i32, %arg1: i32, %arg2: memref<1x1x1024xi32, #tpu.memory_space<smem>>, %arg3: memref<1x1x1024xi32, #tpu.memory_space<smem>>, %arg4: memref<1x128x4xf32, #tpu.memory_space<vmem>>, %arg5: memref<8x8xf32, #tpu.memory_space<vmem>>, %arg6: memref<8x1xf32, #tpu.memory_space<vmem>>, %arg7: memref<1x8x128xf32, #tpu.memory_space<vmem>>, %arg8: memref<128x8xf32, #tpu.memory_space<vmem>>) attributes {dimension_semantics = [#tpu.dimension_semantics<parallel>, #tpu.dimension_semantics<arbitrary>], iteration_bounds = array<i64: 2, 1>, scalar_prefetch = 0 : i64, scratch_operands = 1 : i64, tpu.core_type = #tpu.core_type<tc>, window_params = [{transform_indices = @transform_0, window_bounds = array<i64: 1, 1, 1024>}, {transform_indices = @transform_1, window_bounds = array<i64: 1, 1, 1024>}, {transform_indices = @transform_2, window_bounds = array<i64: 1, 128, 4>}, {pipeline_mode = #tpu.pipeline_mode<synchronous>, transform_indices = @transform_3, window_bounds = array<i64: 8, 8>}, {pipeline_mode = #tpu.pipeline_mode<synchronous>, transform_indices = @transform_4, window_bounds = array<i64: 8, 1>}, {transform_indices = @transform_5, window_bounds = array<i64: 1, 8, 128>}]} {
    %c128_i32 = arith.constant 128 : i32
    %0 = arith.muli %arg1, %c128_i32 : i32
    %1 = tpu.assume_multiple %0, 128 : i32
    %c0 = arith.constant 0 : index
    %2 = arith.index_cast %1 : i32 to index
    %c0_0 = arith.constant 0 : index
    %3 = vector.load %arg4[%c0, %2, %c0_0] : memref<1x128x4xf32, #tpu.memory_space<vmem>>, vector<1x128x4xf32>
    %4 = vector.shape_cast %3 : vector<1x128x4xf32> to vector<128x4xf32>
    %c0_1 = arith.constant 0 : index
    %c0_2 = arith.constant 0 : index
    %5 = vector.load %arg8[%c0_1, %c0_2] : memref<128x8xf32, #tpu.memory_space<vmem>>, vector<128x4xf32>
    tpu.vector_store %arg8[%c0_1, %c0_2], %4 {strides = array<i32>} : memref<128x8xf32, #tpu.memory_space<vmem>>, vector<128x4xf32>,
    %c0_i32 = arith.constant 0 : i32
    %c16_i32 = arith.constant 16 : i32
    %6 = arith.addi %c0_i32, %c16_i32 : i32
    %c1_i32 = arith.constant 1 : i32
    scf.for %arg9 = %c0_i32 to %6 step %c1_i32  : i32 {
      %c8_i32 = arith.constant 8 : i32
      %18 = arith.muli %arg9, %c8_i32 : i32
      %19 = tpu.assume_multiple %18, 8 : i32
      %c0_i32_14 = arith.constant 0 : i32
      %20 = arith.addi %19, %c0_i32_14 : i32
      %c8_i32_15 = arith.constant 8 : i32
      %21 = arith.muli %20, %c8_i32_15 : i32
      %c0_16 = arith.constant 0 : index
      %c0_17 = arith.constant 0 : index
      %22 = arith.index_cast %21 : i32 to index
      %23 = memref.load %arg2[%c0_16, %c0_17, %22] : memref<1x1x1024xi32, #tpu.memory_space<smem>>
      %c0_18 = arith.constant 0 : index
      %24 = arith.index_cast %23 : i32 to index
      %c0_19 = arith.constant 0 : index
      %25 = vector.load %arg4[%c0_18, %24, %c0_19] : memref<1x128x4xf32, #tpu.memory_space<vmem>>, vector<1x1x4xf32>
      %26 = vector.shape_cast %25 : vector<1x1x4xf32> to vector<1x4xf32>
      %c0_20 = arith.constant 0 : index
      %c0_21 = arith.constant 0 : index
      %27 = arith.index_cast %21 : i32 to index
      %28 = memref.load %arg3[%c0_20, %c0_21, %27] : memref<1x1x1024xi32, #tpu.memory_space<smem>>
      %c0_22 = arith.constant 0 : index
      %29 = arith.index_cast %28 : i32 to index
      %c0_23 = arith.constant 0 : index
      %30 = vector.load %arg4[%c0_22, %29, %c0_23] : memref<1x128x4xf32, #tpu.memory_space<vmem>>, vector<1x1x4xf32>
      %31 = vector.shape_cast %30 : vector<1x1x4xf32> to vector<1x4xf32>
      %32 = arith.subf %26, %31 : vector<1x4xf32>
      %c1_i32_24 = arith.constant 1 : i32
      %33 = arith.addi %21, %c1_i32_24 : i32
      %c0_25 = arith.constant 0 : index
      %c0_26 = arith.constant 0 : index
      %34 = arith.index_cast %33 : i32 to index
      %35 = memref.load %arg2[%c0_25, %c0_26, %34] : memref<1x1x1024xi32, #tpu.memory_space<smem>>
      %c0_27 = arith.constant 0 : index
      %36 = arith.index_cast %35 : i32 to index
      %c0_28 = arith.constant 0 : index
      %37 = vector.load %arg4[%c0_27, %36, %c0_28] : memref<1x128x4xf32, #tpu.memory_space<vmem>>, vector<1x1x4xf32>
      %38 = vector.shape_cast %37 : vector<1x1x4xf32> to vector<1x4xf32>
      %c1_i32_29 = arith.constant 1 : i32
      %39 = arith.addi %21, %c1_i32_29 : i32
      %c0_30 = arith.constant 0 : index
      %c0_31 = arith.constant 0 : index
      %40 = arith.index_cast %39 : i32 to index
      %41 = memref.load %arg3[%c0_30, %c0_31, %40] : memref<1x1x1024xi32, #tpu.memory_space<smem>>
      %c0_32 = arith.constant 0 : index
      %42 = arith.index_cast %41 : i32 to index
      %c0_33 = arith.constant 0 : index
      %43 = vector.load %arg4[%c0_32, %42, %c0_33] : memref<1x128x4xf32, #tpu.memory_space<vmem>>, vector<1x1x4xf32>
      %44 = vector.shape_cast %43 : vector<1x1x4xf32> to vector<1x4xf32>
      %45 = arith.subf %38, %44 : vector<1x4xf32>
      %46 = arith.maximumf %32, %45 : vector<1x4xf32>
      %c2_i32 = arith.constant 2 : i32
      %47 = arith.addi %21, %c2_i32 : i32
      %c0_34 = arith.constant 0 : index
      %c0_35 = arith.constant 0 : index
      %48 = arith.index_cast %47 : i32 to index
      %49 = memref.load %arg2[%c0_34, %c0_35, %48] : memref<1x1x1024xi32, #tpu.memory_space<smem>>
      %c0_36 = arith.constant 0 : index
      %50 = arith.index_cast %49 : i32 to index
      %c0_37 = arith.constant 0 : index
      %51 = vector.load %arg4[%c0_36, %50, %c0_37] : memref<1x128x4xf32, #tpu.memory_space<vmem>>, vector<1x1x4xf32>
      %52 = vector.shape_cast %51 : vector<1x1x4xf32> to vector<1x4xf32>
      %c2_i32_38 = arith.constant 2 : i32
      %53 = arith.addi %21, %c2_i32_38 : i32
      %c0_39 = arith.constant 0 : index
      %c0_40 = arith.constant 0 : index
      %54 = arith.index_cast %53 : i32 to index
      %55 = memref.load %arg3[%c0_39, %c0_40, %54] : memref<1x1x1024xi32, #tpu.memory_space<smem>>
      %c0_41 = arith.constant 0 : index
      %56 = arith.index_cast %55 : i32 to index
      %c0_42 = arith.constant 0 : index
      %57 = vector.load %arg4[%c0_41, %56, %c0_42] : memref<1x128x4xf32, #tpu.memory_space<vmem>>, vector<1x1x4xf32>
      %58 = vector.shape_cast %57 : vector<1x1x4xf32> to vector<1x4xf32>
      %59 = arith.subf %52, %58 : vector<1x4xf32>
      %60 = arith.maximumf %46, %59 : vector<1x4xf32>
      %c3_i32 = arith.constant 3 : i32
      %61 = arith.addi %21, %c3_i32 : i32
      %c0_43 = arith.constant 0 : index
      %c0_44 = arith.constant 0 : index
      %62 = arith.index_cast %61 : i32 to index
      %63 = memref.load %arg2[%c0_43, %c0_44, %62] : memref<1x1x1024xi32, #tpu.memory_space<smem>>
      %c0_45 = arith.constant 0 : index
      %64 = arith.index_cast %63 : i32 to index
      %c0_46 = arith.constant 0 : index
      %65 = vector.load %arg4[%c0_45, %64, %c0_46] : memref<1x128x4xf32, #tpu.memory_space<vmem>>, vector<1x1x4xf32>
      %66 = vector.shape_cast %65 : vector<1x1x4xf32> to vector<1x4xf32>
      %c3_i32_47 = arith.constant 3 : i32
      %67 = arith.addi %21, %c3_i32_47 : i32
      %c0_48 = arith.constant 0 : index
      %c0_49 = arith.constant 0 : index
      %68 = arith.index_cast %67 : i32 to index
      %69 = memref.load %arg3[%c0_48, %c0_49, %68] : memref<1x1x1024xi32, #tpu.memory_space<smem>>
      %c0_50 = arith.constant 0 : index
      %70 = arith.index_cast %69 : i32 to index
      %c0_51 = arith.constant 0 : index
      %71 = vector.load %arg4[%c0_50, %70, %c0_51] : memref<1x128x4xf32, #tpu.memory_space<vmem>>, vector<1x1x4xf32>
      %72 = vector.shape_cast %71 : vector<1x1x4xf32> to vector<1x4xf32>
      %73 = arith.subf %66, %72 : vector<1x4xf32>
      %74 = arith.maximumf %60, %73 : vector<1x4xf32>
      %c4_i32 = arith.constant 4 : i32
      %75 = arith.addi %21, %c4_i32 : i32
      %c0_52 = arith.constant 0 : index
      %c0_53 = arith.constant 0 : index
      %76 = arith.index_cast %75 : i32 to index
      %77 = memref.load %arg2[%c0_52, %c0_53, %76] : memref<1x1x1024xi32, #tpu.memory_space<smem>>
      %c0_54 = arith.constant 0 : index
      %78 = arith.index_cast %77 : i32 to index
      %c0_55 = arith.constant 0 : index
      %79 = vector.load %arg4[%c0_54, %78, %c0_55] : memref<1x128x4xf32, #tpu.memory_space<vmem>>, vector<1x1x4xf32>
      %80 = vector.shape_cast %79 : vector<1x1x4xf32> to vector<1x4xf32>
      %c4_i32_56 = arith.constant 4 : i32
      %81 = arith.addi %21, %c4_i32_56 : i32
      %c0_57 = arith.constant 0 : index
      %c0_58 = arith.constant 0 : index
      %82 = arith.index_cast %81 : i32 to index
      %83 = memref.load %arg3[%c0_57, %c0_58, %82] : memref<1x1x1024xi32, #tpu.memory_space<smem>>
      %c0_59 = arith.constant 0 : index
      %84 = arith.index_cast %83 : i32 to index
      %c0_60 = arith.constant 0 : index
      %85 = vector.load %arg4[%c0_59, %84, %c0_60] : memref<1x128x4xf32, #tpu.memory_space<vmem>>, vector<1x1x4xf32>
      %86 = vector.shape_cast %85 : vector<1x1x4xf32> to vector<1x4xf32>
      %87 = arith.subf %80, %86 : vector<1x4xf32>
      %88 = arith.maximumf %74, %87 : vector<1x4xf32>
      %c5_i32 = arith.constant 5 : i32
      %89 = arith.addi %21, %c5_i32 : i32
      %c0_61 = arith.constant 0 : index
      %c0_62 = arith.constant 0 : index
      %90 = arith.index_cast %89 : i32 to index
      %91 = memref.load %arg2[%c0_61, %c0_62, %90] : memref<1x1x1024xi32, #tpu.memory_space<smem>>
      %c0_63 = arith.constant 0 : index
      %92 = arith.index_cast %91 : i32 to index
      %c0_64 = arith.constant 0 : index
      %93 = vector.load %arg4[%c0_63, %92, %c0_64] : memref<1x128x4xf32, #tpu.memory_space<vmem>>, vector<1x1x4xf32>
      %94 = vector.shape_cast %93 : vector<1x1x4xf32> to vector<1x4xf32>
      %c5_i32_65 = arith.constant 5 : i32
      %95 = arith.addi %21, %c5_i32_65 : i32
      %c0_66 = arith.constant 0 : index
      %c0_67 = arith.constant 0 : index
      %96 = arith.index_cast %95 : i32 to index
      %97 = memref.load %arg3[%c0_66, %c0_67, %96] : memref<1x1x1024xi32, #tpu.memory_space<smem>>
      %c0_68 = arith.constant 0 : index
      %98 = arith.index_cast %97 : i32 to index
      %c0_69 = arith.constant 0 : index
      %99 = vector.load %arg4[%c0_68, %98, %c0_69] : memref<1x128x4xf32, #tpu.memory_space<vmem>>, vector<1x1x4xf32>
      %100 = vector.shape_cast %99 : vector<1x1x4xf32> to vector<1x4xf32>
      %101 = arith.subf %94, %100 : vector<1x4xf32>
      %102 = arith.maximumf %88, %101 : vector<1x4xf32>
      %c6_i32 = arith.constant 6 : i32
      %103 = arith.addi %21, %c6_i32 : i32
      %c0_70 = arith.constant 0 : index
      %c0_71 = arith.constant 0 : index
      %104 = arith.index_cast %103 : i32 to index
      %105 = memref.load %arg2[%c0_70, %c0_71, %104] : memref<1x1x1024xi32, #tpu.memory_space<smem>>
      %c0_72 = arith.constant 0 : index
      %106 = arith.index_cast %105 : i32 to index
      %c0_73 = arith.constant 0 : index
      %107 = vector.load %arg4[%c0_72, %106, %c0_73] : memref<1x128x4xf32, #tpu.memory_space<vmem>>, vector<1x1x4xf32>
      %108 = vector.shape_cast %107 : vector<1x1x4xf32> to vector<1x4xf32>
      %c6_i32_74 = arith.constant 6 : i32
      %109 = arith.addi %21, %c6_i32_74 : i32
      %c0_75 = arith.constant 0 : index
      %c0_76 = arith.constant 0 : index
      %110 = arith.index_cast %109 : i32 to index
      %111 = memref.load %arg3[%c0_75, %c0_76, %110] : memref<1x1x1024xi32, #tpu.memory_space<smem>>
      %c0_77 = arith.constant 0 : index
      %112 = arith.index_cast %111 : i32 to index
      %c0_78 = arith.constant 0 : index
      %113 = vector.load %arg4[%c0_77, %112, %c0_78] : memref<1x128x4xf32, #tpu.memory_space<vmem>>, vector<1x1x4xf32>
      %114 = vector.shape_cast %113 : vector<1x1x4xf32> to vector<1x4xf32>
      %115 = arith.subf %108, %114 : vector<1x4xf32>
      %116 = arith.maximumf %102, %115 : vector<1x4xf32>
      %c7_i32 = arith.constant 7 : i32
      %117 = arith.addi %21, %c7_i32 : i32
      %c0_79 = arith.constant 0 : index
      %c0_80 = arith.constant 0 : index
      %118 = arith.index_cast %117 : i32 to index
      %119 = memref.load %arg2[%c0_79, %c0_80, %118] : memref<1x1x1024xi32, #tpu.memory_space<smem>>
      %c0_81 = arith.constant 0 : index
      %120 = arith.index_cast %119 : i32 to index
      %c0_82 = arith.constant 0 : index
      %121 = vector.load %arg4[%c0_81, %120, %c0_82] : memref<1x128x4xf32, #tpu.memory_space<vmem>>, vector<1x1x4xf32>
      %122 = vector.shape_cast %121 : vector<1x1x4xf32> to vector<1x4xf32>
      %c7_i32_83 = arith.constant 7 : i32
      %123 = arith.addi %21, %c7_i32_83 : i32
      %c0_84 = arith.constant 0 : index
      %c0_85 = arith.constant 0 : index
      %124 = arith.index_cast %123 : i32 to index
      %125 = memref.load %arg3[%c0_84, %c0_85, %124] : memref<1x1x1024xi32, #tpu.memory_space<smem>>
      %c0_86 = arith.constant 0 : index
      %126 = arith.index_cast %125 : i32 to index
      %c0_87 = arith.constant 0 : index
      %127 = vector.load %arg4[%c0_86, %126, %c0_87] : memref<1x128x4xf32, #tpu.memory_space<vmem>>, vector<1x1x4xf32>
      %128 = vector.shape_cast %127 : vector<1x1x4xf32> to vector<1x4xf32>
      %129 = arith.subf %122, %128 : vector<1x4xf32>
      %130 = arith.maximumf %116, %129 : vector<1x4xf32>
      %c1_i32_88 = arith.constant 1 : i32
      %131 = arith.addi %19, %c1_i32_88 : i32
      %c8_i32_89 = arith.constant 8 : i32
      %132 = arith.muli %131, %c8_i32_89 : i32
      %c0_90 = arith.constant 0 : index
      %c0_91 = arith.constant 0 : index
      %133 = arith.index_cast %132 : i32 to index
      %134 = memref.load %arg2[%c0_90, %c0_91, %133] : memref<1x1x1024xi32, #tpu.memory_space<smem>>
      %c0_92 = arith.constant 0 : index
      %135 = arith.index_cast %134 : i32 to index
      %c0_93 = arith.constant 0 : index
      %136 = vector.load %arg4[%c0_92, %135, %c0_93] : memref<1x128x4xf32, #tpu.memory_space<vmem>>, vector<1x1x4xf32>
      %137 = vector.shape_cast %136 : vector<1x1x4xf32> to vector<1x4xf32>
      %c0_94 = arith.constant 0 : index
      %c0_95 = arith.constant 0 : index
      %138 = arith.index_cast %132 : i32 to index
      %139 = memref.load %arg3[%c0_94, %c0_95, %138] : memref<1x1x1024xi32, #tpu.memory_space<smem>>
      %c0_96 = arith.constant 0 : index
      %140 = arith.index_cast %139 : i32 to index
      %c0_97 = arith.constant 0 : index
      %141 = vector.load %arg4[%c0_96, %140, %c0_97] : memref<1x128x4xf32, #tpu.memory_space<vmem>>, vector<1x1x4xf32>
      %142 = vector.shape_cast %141 : vector<1x1x4xf32> to vector<1x4xf32>
      %143 = arith.subf %137, %142 : vector<1x4xf32>
      %c1_i32_98 = arith.constant 1 : i32
      %144 = arith.addi %132, %c1_i32_98 : i32
      %c0_99 = arith.constant 0 : index
      %c0_100 = arith.constant 0 : index
      %145 = arith.index_cast %144 : i32 to index
      %146 = memref.load %arg2[%c0_99, %c0_100, %145] : memref<1x1x1024xi32, #tpu.memory_space<smem>>
      %c0_101 = arith.constant 0 : index
      %147 = arith.index_cast %146 : i32 to index
      %c0_102 = arith.constant 0 : index
      %148 = vector.load %arg4[%c0_101, %147, %c0_102] : memref<1x128x4xf32, #tpu.memory_space<vmem>>, vector<1x1x4xf32>
      %149 = vector.shape_cast %148 : vector<1x1x4xf32> to vector<1x4xf32>
      %c1_i32_103 = arith.constant 1 : i32
      %150 = arith.addi %132, %c1_i32_103 : i32
      %c0_104 = arith.constant 0 : index
      %c0_105 = arith.constant 0 : index
      %151 = arith.index_cast %150 : i32 to index
      %152 = memref.load %arg3[%c0_104, %c0_105, %151] : memref<1x1x1024xi32, #tpu.memory_space<smem>>
      %c0_106 = arith.constant 0 : index
      %153 = arith.index_cast %152 : i32 to index
      %c0_107 = arith.constant 0 : index
      %154 = vector.load %arg4[%c0_106, %153, %c0_107] : memref<1x128x4xf32, #tpu.memory_space<vmem>>, vector<1x1x4xf32>
      %155 = vector.shape_cast %154 : vector<1x1x4xf32> to vector<1x4xf32>
      %156 = arith.subf %149, %155 : vector<1x4xf32>
      %157 = arith.maximumf %143, %156 : vector<1x4xf32>
      %c2_i32_108 = arith.constant 2 : i32
      %158 = arith.addi %132, %c2_i32_108 : i32
      %c0_109 = arith.constant 0 : index
      %c0_110 = arith.constant 0 : index
      %159 = arith.index_cast %158 : i32 to index
      %160 = memref.load %arg2[%c0_109, %c0_110, %159] : memref<1x1x1024xi32, #tpu.memory_space<smem>>
      %c0_111 = arith.constant 0 : index
      %161 = arith.index_cast %160 : i32 to index
      %c0_112 = arith.constant 0 : index
      %162 = vector.load %arg4[%c0_111, %161, %c0_112] : memref<1x128x4xf32, #tpu.memory_space<vmem>>, vector<1x1x4xf32>
      %163 = vector.shape_cast %162 : vector<1x1x4xf32> to vector<1x4xf32>
      %c2_i32_113 = arith.constant 2 : i32
      %164 = arith.addi %132, %c2_i32_113 : i32
      %c0_114 = arith.constant 0 : index
      %c0_115 = arith.constant 0 : index
      %165 = arith.index_cast %164 : i32 to index
      %166 = memref.load %arg3[%c0_114, %c0_115, %165] : memref<1x1x1024xi32, #tpu.memory_space<smem>>
      %c0_116 = arith.constant 0 : index
      %167 = arith.index_cast %166 : i32 to index
      %c0_117 = arith.constant 0 : index
      %168 = vector.load %arg4[%c0_116, %167, %c0_117] : memref<1x128x4xf32, #tpu.memory_space<vmem>>, vector<1x1x4xf32>
      %169 = vector.shape_cast %168 : vector<1x1x4xf32> to vector<1x4xf32>
      %170 = arith.subf %163, %169 : vector<1x4xf32>
      %171 = arith.maximumf %157, %170 : vector<1x4xf32>
      %c3_i32_118 = arith.constant 3 : i32
      %172 = arith.addi %132, %c3_i32_118 : i32
      %c0_119 = arith.constant 0 : index
      %c0_120 = arith.constant 0 : index
      %173 = arith.index_cast %172 : i32 to index
      %174 = memref.load %arg2[%c0_119, %c0_120, %173] : memref<1x1x1024xi32, #tpu.memory_space<smem>>
      %c0_121 = arith.constant 0 : index
      %175 = arith.index_cast %174 : i32 to index
      %c0_122 = arith.constant 0 : index
      %176 = vector.load %arg4[%c0_121, %175, %c0_122] : memref<1x128x4xf32, #tpu.memory_space<vmem>>, vector<1x1x4xf32>
      %177 = vector.shape_cast %176 : vector<1x1x4xf32> to vector<1x4xf32>
      %c3_i32_123 = arith.constant 3 : i32
      %178 = arith.addi %132, %c3_i32_123 : i32
      %c0_124 = arith.constant 0 : index
      %c0_125 = arith.constant 0 : index
      %179 = arith.index_cast %178 : i32 to index
      %180 = memref.load %arg3[%c0_124, %c0_125, %179] : memref<1x1x1024xi32, #tpu.memory_space<smem>>
      %c0_126 = arith.constant 0 : index
      %181 = arith.index_cast %180 : i32 to index
      %c0_127 = arith.constant 0 : index
      %182 = vector.load %arg4[%c0_126, %181, %c0_127] : memref<1x128x4xf32, #tpu.memory_space<vmem>>, vector<1x1x4xf32>
      %183 = vector.shape_cast %182 : vector<1x1x4xf32> to vector<1x4xf32>
      %184 = arith.subf %177, %183 : vector<1x4xf32>
      %185 = arith.maximumf %171, %184 : vector<1x4xf32>
      %c4_i32_128 = arith.constant 4 : i32
      %186 = arith.addi %132, %c4_i32_128 : i32
      %c0_129 = arith.constant 0 : index
      %c0_130 = arith.constant 0 : index
      %187 = arith.index_cast %186 : i32 to index
      %188 = memref.load %arg2[%c0_129, %c0_130, %187] : memref<1x1x1024xi32, #tpu.memory_space<smem>>
      %c0_131 = arith.constant 0 : index
      %189 = arith.index_cast %188 : i32 to index
      %c0_132 = arith.constant 0 : index
      %190 = vector.load %arg4[%c0_131, %189, %c0_132] : memref<1x128x4xf32, #tpu.memory_space<vmem>>, vector<1x1x4xf32>
      %191 = vector.shape_cast %190 : vector<1x1x4xf32> to vector<1x4xf32>
      %c4_i32_133 = arith.constant 4 : i32
      %192 = arith.addi %132, %c4_i32_133 : i32
      %c0_134 = arith.constant 0 : index
      %c0_135 = arith.constant 0 : index
      %193 = arith.index_cast %192 : i32 to index
      %194 = memref.load %arg3[%c0_134, %c0_135, %193] : memref<1x1x1024xi32, #tpu.memory_space<smem>>
      %c0_136 = arith.constant 0 : index
      %195 = arith.index_cast %194 : i32 to index
      %c0_137 = arith.constant 0 : index
      %196 = vector.load %arg4[%c0_136, %195, %c0_137] : memref<1x128x4xf32, #tpu.memory_space<vmem>>, vector<1x1x4xf32>
      %197 = vector.shape_cast %196 : vector<1x1x4xf32> to vector<1x4xf32>
      %198 = arith.subf %191, %197 : vector<1x4xf32>
      %199 = arith.maximumf %185, %198 : vector<1x4xf32>
      %c5_i32_138 = arith.constant 5 : i32
      %200 = arith.addi %132, %c5_i32_138 : i32
      %c0_139 = arith.constant 0 : index
      %c0_140 = arith.constant 0 : index
      %201 = arith.index_cast %200 : i32 to index
      %202 = memref.load %arg2[%c0_139, %c0_140, %201] : memref<1x1x1024xi32, #tpu.memory_space<smem>>
      %c0_141 = arith.constant 0 : index
      %203 = arith.index_cast %202 : i32 to index
      %c0_142 = arith.constant 0 : index
      %204 = vector.load %arg4[%c0_141, %203, %c0_142] : memref<1x128x4xf32, #tpu.memory_space<vmem>>, vector<1x1x4xf32>
      %205 = vector.shape_cast %204 : vector<1x1x4xf32> to vector<1x4xf32>
      %c5_i32_143 = arith.constant 5 : i32
      %206 = arith.addi %132, %c5_i32_143 : i32
      %c0_144 = arith.constant 0 : index
      %c0_145 = arith.constant 0 : index
      %207 = arith.index_cast %206 : i32 to index
      %208 = memref.load %arg3[%c0_144, %c0_145, %207] : memref<1x1x1024xi32, #tpu.memory_space<smem>>
      %c0_146 = arith.constant 0 : index
      %209 = arith.index_cast %208 : i32 to index
      %c0_147 = arith.constant 0 : index
      %210 = vector.load %arg4[%c0_146, %209, %c0_147] : memref<1x128x4xf32, #tpu.memory_space<vmem>>, vector<1x1x4xf32>
      %211 = vector.shape_cast %210 : vector<1x1x4xf32> to vector<1x4xf32>
      %212 = arith.subf %205, %211 : vector<1x4xf32>
      %213 = arith.maximumf %199, %212 : vector<1x4xf32>
      %c6_i32_148 = arith.constant 6 : i32
      %214 = arith.addi %132, %c6_i32_148 : i32
      %c0_149 = arith.constant 0 : index
      %c0_150 = arith.constant 0 : index
      %215 = arith.index_cast %214 : i32 to index
      %216 = memref.load %arg2[%c0_149, %c0_150, %215] : memref<1x1x1024xi32, #tpu.memory_space<smem>>
      %c0_151 = arith.constant 0 : index
      %217 = arith.index_cast %216 : i32 to index
      %c0_152 = arith.constant 0 : index
      %218 = vector.load %arg4[%c0_151, %217, %c0_152] : memref<1x128x4xf32, #tpu.memory_space<vmem>>, vector<1x1x4xf32>
      %219 = vector.shape_cast %218 : vector<1x1x4xf32> to vector<1x4xf32>
      %c6_i32_153 = arith.constant 6 : i32
      %220 = arith.addi %132, %c6_i32_153 : i32
      %c0_154 = arith.constant 0 : index
      %c0_155 = arith.constant 0 : index
      %221 = arith.index_cast %220 : i32 to index
      %222 = memref.load %arg3[%c0_154, %c0_155, %221] : memref<1x1x1024xi32, #tpu.memory_space<smem>>
      %c0_156 = arith.constant 0 : index
      %223 = arith.index_cast %222 : i32 to index
      %c0_157 = arith.constant 0 : index
      %224 = vector.load %arg4[%c0_156, %223, %c0_157] : memref<1x128x4xf32, #tpu.memory_space<vmem>>, vector<1x1x4xf32>
      %225 = vector.shape_cast %224 : vector<1x1x4xf32> to vector<1x4xf32>
      %226 = arith.subf %219, %225 : vector<1x4xf32>
      %227 = arith.maximumf %213, %226 : vector<1x4xf32>
      %c7_i32_158 = arith.constant 7 : i32
      %228 = arith.addi %132, %c7_i32_158 : i32
      %c0_159 = arith.constant 0 : index
      %c0_160 = arith.constant 0 : index
      %229 = arith.index_cast %228 : i32 to index
      %230 = memref.load %arg2[%c0_159, %c0_160, %229] : memref<1x1x1024xi32, #tpu.memory_space<smem>>
      %c0_161 = arith.constant 0 : index
      %231 = arith.index_cast %230 : i32 to index
      %c0_162 = arith.constant 0 : index
      %232 = vector.load %arg4[%c0_161, %231, %c0_162] : memref<1x128x4xf32, #tpu.memory_space<vmem>>, vector<1x1x4xf32>
      %233 = vector.shape_cast %232 : vector<1x1x4xf32> to vector<1x4xf32>
      %c7_i32_163 = arith.constant 7 : i32
      %234 = arith.addi %132, %c7_i32_163 : i32
      %c0_164 = arith.constant 0 : index
      %c0_165 = arith.constant 0 : index
      %235 = arith.index_cast %234 : i32 to index
      %236 = memref.load %arg3[%c0_164, %c0_165, %235] : memref<1x1x1024xi32, #tpu.memory_space<smem>>
      %c0_166 = arith.constant 0 : index
      %237 = arith.index_cast %236 : i32 to index
      %c0_167 = arith.constant 0 : index
      %238 = vector.load %arg4[%c0_166, %237, %c0_167] : memref<1x128x4xf32, #tpu.memory_space<vmem>>, vector<1x1x4xf32>
      %239 = vector.shape_cast %238 : vector<1x1x4xf32> to vector<1x4xf32>
      %240 = arith.subf %233, %239 : vector<1x4xf32>
      %241 = arith.maximumf %227, %240 : vector<1x4xf32>
      %c2_i32_168 = arith.constant 2 : i32
      %242 = arith.addi %19, %c2_i32_168 : i32
      %c8_i32_169 = arith.constant 8 : i32
      %243 = arith.muli %242, %c8_i32_169 : i32
      %c0_170 = arith.constant 0 : index
      %c0_171 = arith.constant 0 : index
      %244 = arith.index_cast %243 : i32 to index
      %245 = memref.load %arg2[%c0_170, %c0_171, %244] : memref<1x1x1024xi32, #tpu.memory_space<smem>>
      %c0_172 = arith.constant 0 : index
      %246 = arith.index_cast %245 : i32 to index
      %c0_173 = arith.constant 0 : index
      %247 = vector.load %arg4[%c0_172, %246, %c0_173] : memref<1x128x4xf32, #tpu.memory_space<vmem>>, vector<1x1x4xf32>
      %248 = vector.shape_cast %247 : vector<1x1x4xf32> to vector<1x4xf32>
      %c0_174 = arith.constant 0 : index
      %c0_175 = arith.constant 0 : index
      %249 = arith.index_cast %243 : i32 to index
      %250 = memref.load %arg3[%c0_174, %c0_175, %249] : memref<1x1x1024xi32, #tpu.memory_space<smem>>
      %c0_176 = arith.constant 0 : index
      %251 = arith.index_cast %250 : i32 to index
      %c0_177 = arith.constant 0 : index
      %252 = vector.load %arg4[%c0_176, %251, %c0_177] : memref<1x128x4xf32, #tpu.memory_space<vmem>>, vector<1x1x4xf32>
      %253 = vector.shape_cast %252 : vector<1x1x4xf32> to vector<1x4xf32>
      %254 = arith.subf %248, %253 : vector<1x4xf32>
      %c1_i32_178 = arith.constant 1 : i32
      %255 = arith.addi %243, %c1_i32_178 : i32
      %c0_179 = arith.constant 0 : index
      %c0_180 = arith.constant 0 : index
      %256 = arith.index_cast %255 : i32 to index
      %257 = memref.load %arg2[%c0_179, %c0_180, %256] : memref<1x1x1024xi32, #tpu.memory_space<smem>>
      %c0_181 = arith.constant 0 : index
      %258 = arith.index_cast %257 : i32 to index
      %c0_182 = arith.constant 0 : index
      %259 = vector.load %arg4[%c0_181, %258, %c0_182] : memref<1x128x4xf32, #tpu.memory_space<vmem>>, vector<1x1x4xf32>
      %260 = vector.shape_cast %259 : vector<1x1x4xf32> to vector<1x4xf32>
      %c1_i32_183 = arith.constant 1 : i32
      %261 = arith.addi %243, %c1_i32_183 : i32
      %c0_184 = arith.constant 0 : index
      %c0_185 = arith.constant 0 : index
      %262 = arith.index_cast %261 : i32 to index
      %263 = memref.load %arg3[%c0_184, %c0_185, %262] : memref<1x1x1024xi32, #tpu.memory_space<smem>>
      %c0_186 = arith.constant 0 : index
      %264 = arith.index_cast %263 : i32 to index
      %c0_187 = arith.constant 0 : index
      %265 = vector.load %arg4[%c0_186, %264, %c0_187] : memref<1x128x4xf32, #tpu.memory_space<vmem>>, vector<1x1x4xf32>
      %266 = vector.shape_cast %265 : vector<1x1x4xf32> to vector<1x4xf32>
      %267 = arith.subf %260, %266 : vector<1x4xf32>
      %268 = arith.maximumf %254, %267 : vector<1x4xf32>
      %c2_i32_188 = arith.constant 2 : i32
      %269 = arith.addi %243, %c2_i32_188 : i32
      %c0_189 = arith.constant 0 : index
      %c0_190 = arith.constant 0 : index
      %270 = arith.index_cast %269 : i32 to index
      %271 = memref.load %arg2[%c0_189, %c0_190, %270] : memref<1x1x1024xi32, #tpu.memory_space<smem>>
      %c0_191 = arith.constant 0 : index
      %272 = arith.index_cast %271 : i32 to index
      %c0_192 = arith.constant 0 : index
      %273 = vector.load %arg4[%c0_191, %272, %c0_192] : memref<1x128x4xf32, #tpu.memory_space<vmem>>, vector<1x1x4xf32>
      %274 = vector.shape_cast %273 : vector<1x1x4xf32> to vector<1x4xf32>
      %c2_i32_193 = arith.constant 2 : i32
      %275 = arith.addi %243, %c2_i32_193 : i32
      %c0_194 = arith.constant 0 : index
      %c0_195 = arith.constant 0 : index
      %276 = arith.index_cast %275 : i32 to index
      %277 = memref.load %arg3[%c0_194, %c0_195, %276] : memref<1x1x1024xi32, #tpu.memory_space<smem>>
      %c0_196 = arith.constant 0 : index
      %278 = arith.index_cast %277 : i32 to index
      %c0_197 = arith.constant 0 : index
      %279 = vector.load %arg4[%c0_196, %278, %c0_197] : memref<1x128x4xf32, #tpu.memory_space<vmem>>, vector<1x1x4xf32>
      %280 = vector.shape_cast %279 : vector<1x1x4xf32> to vector<1x4xf32>
      %281 = arith.subf %274, %280 : vector<1x4xf32>
      %282 = arith.maximumf %268, %281 : vector<1x4xf32>
      %c3_i32_198 = arith.constant 3 : i32
      %283 = arith.addi %243, %c3_i32_198 : i32
      %c0_199 = arith.constant 0 : index
      %c0_200 = arith.constant 0 : index
      %284 = arith.index_cast %283 : i32 to index
      %285 = memref.load %arg2[%c0_199, %c0_200, %284] : memref<1x1x1024xi32, #tpu.memory_space<smem>>
      %c0_201 = arith.constant 0 : index
      %286 = arith.index_cast %285 : i32 to index
      %c0_202 = arith.constant 0 : index
      %287 = vector.load %arg4[%c0_201, %286, %c0_202] : memref<1x128x4xf32, #tpu.memory_space<vmem>>, vector<1x1x4xf32>
      %288 = vector.shape_cast %287 : vector<1x1x4xf32> to vector<1x4xf32>
      %c3_i32_203 = arith.constant 3 : i32
      %289 = arith.addi %243, %c3_i32_203 : i32
      %c0_204 = arith.constant 0 : index
      %c0_205 = arith.constant 0 : index
      %290 = arith.index_cast %289 : i32 to index
      %291 = memref.load %arg3[%c0_204, %c0_205, %290] : memref<1x1x1024xi32, #tpu.memory_space<smem>>
      %c0_206 = arith.constant 0 : index
      %292 = arith.index_cast %291 : i32 to index
      %c0_207 = arith.constant 0 : index
      %293 = vector.load %arg4[%c0_206, %292, %c0_207] : memref<1x128x4xf32, #tpu.memory_space<vmem>>, vector<1x1x4xf32>
      %294 = vector.shape_cast %293 : vector<1x1x4xf32> to vector<1x4xf32>
      %295 = arith.subf %288, %294 : vector<1x4xf32>
      %296 = arith.maximumf %282, %295 : vector<1x4xf32>
      %c4_i32_208 = arith.constant 4 : i32
      %297 = arith.addi %243, %c4_i32_208 : i32
      %c0_209 = arith.constant 0 : index
      %c0_210 = arith.constant 0 : index
      %298 = arith.index_cast %297 : i32 to index
      %299 = memref.load %arg2[%c0_209, %c0_210, %298] : memref<1x1x1024xi32, #tpu.memory_space<smem>>
      %c0_211 = arith.constant 0 : index
      %300 = arith.index_cast %299 : i32 to index
      %c0_212 = arith.constant 0 : index
      %301 = vector.load %arg4[%c0_211, %300, %c0_212] : memref<1x128x4xf32, #tpu.memory_space<vmem>>, vector<1x1x4xf32>
      %302 = vector.shape_cast %301 : vector<1x1x4xf32> to vector<1x4xf32>
      %c4_i32_213 = arith.constant 4 : i32
      %303 = arith.addi %243, %c4_i32_213 : i32
      %c0_214 = arith.constant 0 : index
      %c0_215 = arith.constant 0 : index
      %304 = arith.index_cast %303 : i32 to index
      %305 = memref.load %arg3[%c0_214, %c0_215, %304] : memref<1x1x1024xi32, #tpu.memory_space<smem>>
      %c0_216 = arith.constant 0 : index
      %306 = arith.index_cast %305 : i32 to index
      %c0_217 = arith.constant 0 : index
      %307 = vector.load %arg4[%c0_216, %306, %c0_217] : memref<1x128x4xf32, #tpu.memory_space<vmem>>, vector<1x1x4xf32>
      %308 = vector.shape_cast %307 : vector<1x1x4xf32> to vector<1x4xf32>
      %309 = arith.subf %302, %308 : vector<1x4xf32>
      %310 = arith.maximumf %296, %309 : vector<1x4xf32>
      %c5_i32_218 = arith.constant 5 : i32
      %311 = arith.addi %243, %c5_i32_218 : i32
      %c0_219 = arith.constant 0 : index
      %c0_220 = arith.constant 0 : index
      %312 = arith.index_cast %311 : i32 to index
      %313 = memref.load %arg2[%c0_219, %c0_220, %312] : memref<1x1x1024xi32, #tpu.memory_space<smem>>
      %c0_221 = arith.constant 0 : index
      %314 = arith.index_cast %313 : i32 to index
      %c0_222 = arith.constant 0 : index
      %315 = vector.load %arg4[%c0_221, %314, %c0_222] : memref<1x128x4xf32, #tpu.memory_space<vmem>>, vector<1x1x4xf32>
      %316 = vector.shape_cast %315 : vector<1x1x4xf32> to vector<1x4xf32>
      %c5_i32_223 = arith.constant 5 : i32
      %317 = arith.addi %243, %c5_i32_223 : i32
      %c0_224 = arith.constant 0 : index
      %c0_225 = arith.constant 0 : index
      %318 = arith.index_cast %317 : i32 to index
      %319 = memref.load %arg3[%c0_224, %c0_225, %318] : memref<1x1x1024xi32, #tpu.memory_space<smem>>
      %c0_226 = arith.constant 0 : index
      %320 = arith.index_cast %319 : i32 to index
      %c0_227 = arith.constant 0 : index
      %321 = vector.load %arg4[%c0_226, %320, %c0_227] : memref<1x128x4xf32, #tpu.memory_space<vmem>>, vector<1x1x4xf32>
      %322 = vector.shape_cast %321 : vector<1x1x4xf32> to vector<1x4xf32>
      %323 = arith.subf %316, %322 : vector<1x4xf32>
      %324 = arith.maximumf %310, %323 : vector<1x4xf32>
      %c6_i32_228 = arith.constant 6 : i32
      %325 = arith.addi %243, %c6_i32_228 : i32
      %c0_229 = arith.constant 0 : index
      %c0_230 = arith.constant 0 : index
      %326 = arith.index_cast %325 : i32 to index
      %327 = memref.load %arg2[%c0_229, %c0_230, %326] : memref<1x1x1024xi32, #tpu.memory_space<smem>>
      %c0_231 = arith.constant 0 : index
      %328 = arith.index_cast %327 : i32 to index
      %c0_232 = arith.constant 0 : index
      %329 = vector.load %arg4[%c0_231, %328, %c0_232] : memref<1x128x4xf32, #tpu.memory_space<vmem>>, vector<1x1x4xf32>
      %330 = vector.shape_cast %329 : vector<1x1x4xf32> to vector<1x4xf32>
      %c6_i32_233 = arith.constant 6 : i32
      %331 = arith.addi %243, %c6_i32_233 : i32
      %c0_234 = arith.constant 0 : index
      %c0_235 = arith.constant 0 : index
      %332 = arith.index_cast %331 : i32 to index
      %333 = memref.load %arg3[%c0_234, %c0_235, %332] : memref<1x1x1024xi32, #tpu.memory_space<smem>>
      %c0_236 = arith.constant 0 : index
      %334 = arith.index_cast %333 : i32 to index
      %c0_237 = arith.constant 0 : index
      %335 = vector.load %arg4[%c0_236, %334, %c0_237] : memref<1x128x4xf32, #tpu.memory_space<vmem>>, vector<1x1x4xf32>
      %336 = vector.shape_cast %335 : vector<1x1x4xf32> to vector<1x4xf32>
      %337 = arith.subf %330, %336 : vector<1x4xf32>
      %338 = arith.maximumf %324, %337 : vector<1x4xf32>
      %c7_i32_238 = arith.constant 7 : i32
      %339 = arith.addi %243, %c7_i32_238 : i32
      %c0_239 = arith.constant 0 : index
      %c0_240 = arith.constant 0 : index
      %340 = arith.index_cast %339 : i32 to index
      %341 = memref.load %arg2[%c0_239, %c0_240, %340] : memref<1x1x1024xi32, #tpu.memory_space<smem>>
      %c0_241 = arith.constant 0 : index
      %342 = arith.index_cast %341 : i32 to index
      %c0_242 = arith.constant 0 : index
      %343 = vector.load %arg4[%c0_241, %342, %c0_242] : memref<1x128x4xf32, #tpu.memory_space<vmem>>, vector<1x1x4xf32>
      %344 = vector.shape_cast %343 : vector<1x1x4xf32> to vector<1x4xf32>
      %c7_i32_243 = arith.constant 7 : i32
      %345 = arith.addi %243, %c7_i32_243 : i32
      %c0_244 = arith.constant 0 : index
      %c0_245 = arith.constant 0 : index
      %346 = arith.index_cast %345 : i32 to index
      %347 = memref.load %arg3[%c0_244, %c0_245, %346] : memref<1x1x1024xi32, #tpu.memory_space<smem>>
      %c0_246 = arith.constant 0 : index
      %348 = arith.index_cast %347 : i32 to index
      %c0_247 = arith.constant 0 : index
      %349 = vector.load %arg4[%c0_246, %348, %c0_247] : memref<1x128x4xf32, #tpu.memory_space<vmem>>, vector<1x1x4xf32>
      %350 = vector.shape_cast %349 : vector<1x1x4xf32> to vector<1x4xf32>
      %351 = arith.subf %344, %350 : vector<1x4xf32>
      %352 = arith.maximumf %338, %351 : vector<1x4xf32>
      %c3_i32_248 = arith.constant 3 : i32
      %353 = arith.addi %19, %c3_i32_248 : i32
      %c8_i32_249 = arith.constant 8 : i32
      %354 = arith.muli %353, %c8_i32_249 : i32
      %c0_250 = arith.constant 0 : index
      %c0_251 = arith.constant 0 : index
      %355 = arith.index_cast %354 : i32 to index
      %356 = memref.load %arg2[%c0_250, %c0_251, %355] : memref<1x1x1024xi32, #tpu.memory_space<smem>>
      %c0_252 = arith.constant 0 : index
      %357 = arith.index_cast %356 : i32 to index
      %c0_253 = arith.constant 0 : index
      %358 = vector.load %arg4[%c0_252, %357, %c0_253] : memref<1x128x4xf32, #tpu.memory_space<vmem>>, vector<1x1x4xf32>
      %359 = vector.shape_cast %358 : vector<1x1x4xf32> to vector<1x4xf32>
      %c0_254 = arith.constant 0 : index
      %c0_255 = arith.constant 0 : index
      %360 = arith.index_cast %354 : i32 to index
      %361 = memref.load %arg3[%c0_254, %c0_255, %360] : memref<1x1x1024xi32, #tpu.memory_space<smem>>
      %c0_256 = arith.constant 0 : index
      %362 = arith.index_cast %361 : i32 to index
      %c0_257 = arith.constant 0 : index
      %363 = vector.load %arg4[%c0_256, %362, %c0_257] : memref<1x128x4xf32, #tpu.memory_space<vmem>>, vector<1x1x4xf32>
      %364 = vector.shape_cast %363 : vector<1x1x4xf32> to vector<1x4xf32>
      %365 = arith.subf %359, %364 : vector<1x4xf32>
      %c1_i32_258 = arith.constant 1 : i32
      %366 = arith.addi %354, %c1_i32_258 : i32
      %c0_259 = arith.constant 0 : index
      %c0_260 = arith.constant 0 : index
      %367 = arith.index_cast %366 : i32 to index
      %368 = memref.load %arg2[%c0_259, %c0_260, %367] : memref<1x1x1024xi32, #tpu.memory_space<smem>>
      %c0_261 = arith.constant 0 : index
      %369 = arith.index_cast %368 : i32 to index
      %c0_262 = arith.constant 0 : index
      %370 = vector.load %arg4[%c0_261, %369, %c0_262] : memref<1x128x4xf32, #tpu.memory_space<vmem>>, vector<1x1x4xf32>
      %371 = vector.shape_cast %370 : vector<1x1x4xf32> to vector<1x4xf32>
      %c1_i32_263 = arith.constant 1 : i32
      %372 = arith.addi %354, %c1_i32_263 : i32
      %c0_264 = arith.constant 0 : index
      %c0_265 = arith.constant 0 : index
      %373 = arith.index_cast %372 : i32 to index
      %374 = memref.load %arg3[%c0_264, %c0_265, %373] : memref<1x1x1024xi32, #tpu.memory_space<smem>>
      %c0_266 = arith.constant 0 : index
      %375 = arith.index_cast %374 : i32 to index
      %c0_267 = arith.constant 0 : index
      %376 = vector.load %arg4[%c0_266, %375, %c0_267] : memref<1x128x4xf32, #tpu.memory_space<vmem>>, vector<1x1x4xf32>
      %377 = vector.shape_cast %376 : vector<1x1x4xf32> to vector<1x4xf32>
      %378 = arith.subf %371, %377 : vector<1x4xf32>
      %379 = arith.maximumf %365, %378 : vector<1x4xf32>
      %c2_i32_268 = arith.constant 2 : i32
      %380 = arith.addi %354, %c2_i32_268 : i32
      %c0_269 = arith.constant 0 : index
      %c0_270 = arith.constant 0 : index
      %381 = arith.index_cast %380 : i32 to index
      %382 = memref.load %arg2[%c0_269, %c0_270, %381] : memref<1x1x1024xi32, #tpu.memory_space<smem>>
      %c0_271 = arith.constant 0 : index
      %383 = arith.index_cast %382 : i32 to index
      %c0_272 = arith.constant 0 : index
      %384 = vector.load %arg4[%c0_271, %383, %c0_272] : memref<1x128x4xf32, #tpu.memory_space<vmem>>, vector<1x1x4xf32>
      %385 = vector.shape_cast %384 : vector<1x1x4xf32> to vector<1x4xf32>
      %c2_i32_273 = arith.constant 2 : i32
      %386 = arith.addi %354, %c2_i32_273 : i32
      %c0_274 = arith.constant 0 : index
      %c0_275 = arith.constant 0 : index
      %387 = arith.index_cast %386 : i32 to index
      %388 = memref.load %arg3[%c0_274, %c0_275, %387] : memref<1x1x1024xi32, #tpu.memory_space<smem>>
      %c0_276 = arith.constant 0 : index
      %389 = arith.index_cast %388 : i32 to index
      %c0_277 = arith.constant 0 : index
      %390 = vector.load %arg4[%c0_276, %389, %c0_277] : memref<1x128x4xf32, #tpu.memory_space<vmem>>, vector<1x1x4xf32>
      %391 = vector.shape_cast %390 : vector<1x1x4xf32> to vector<1x4xf32>
      %392 = arith.subf %385, %391 : vector<1x4xf32>
      %393 = arith.maximumf %379, %392 : vector<1x4xf32>
      %c3_i32_278 = arith.constant 3 : i32
      %394 = arith.addi %354, %c3_i32_278 : i32
      %c0_279 = arith.constant 0 : index
      %c0_280 = arith.constant 0 : index
      %395 = arith.index_cast %394 : i32 to index
      %396 = memref.load %arg2[%c0_279, %c0_280, %395] : memref<1x1x1024xi32, #tpu.memory_space<smem>>
      %c0_281 = arith.constant 0 : index
      %397 = arith.index_cast %396 : i32 to index
      %c0_282 = arith.constant 0 : index
      %398 = vector.load %arg4[%c0_281, %397, %c0_282] : memref<1x128x4xf32, #tpu.memory_space<vmem>>, vector<1x1x4xf32>
      %399 = vector.shape_cast %398 : vector<1x1x4xf32> to vector<1x4xf32>
      %c3_i32_283 = arith.constant 3 : i32
      %400 = arith.addi %354, %c3_i32_283 : i32
      %c0_284 = arith.constant 0 : index
      %c0_285 = arith.constant 0 : index
      %401 = arith.index_cast %400 : i32 to index
      %402 = memref.load %arg3[%c0_284, %c0_285, %401] : memref<1x1x1024xi32, #tpu.memory_space<smem>>
      %c0_286 = arith.constant 0 : index
      %403 = arith.index_cast %402 : i32 to index
      %c0_287 = arith.constant 0 : index
      %404 = vector.load %arg4[%c0_286, %403, %c0_287] : memref<1x128x4xf32, #tpu.memory_space<vmem>>, vector<1x1x4xf32>
      %405 = vector.shape_cast %404 : vector<1x1x4xf32> to vector<1x4xf32>
      %406 = arith.subf %399, %405 : vector<1x4xf32>
      %407 = arith.maximumf %393, %406 : vector<1x4xf32>
      %c4_i32_288 = arith.constant 4 : i32
      %408 = arith.addi %354, %c4_i32_288 : i32
      %c0_289 = arith.constant 0 : index
      %c0_290 = arith.constant 0 : index
      %409 = arith.index_cast %408 : i32 to index
      %410 = memref.load %arg2[%c0_289, %c0_290, %409] : memref<1x1x1024xi32, #tpu.memory_space<smem>>
      %c0_291 = arith.constant 0 : index
      %411 = arith.index_cast %410 : i32 to index
      %c0_292 = arith.constant 0 : index
      %412 = vector.load %arg4[%c0_291, %411, %c0_292] : memref<1x128x4xf32, #tpu.memory_space<vmem>>, vector<1x1x4xf32>
      %413 = vector.shape_cast %412 : vector<1x1x4xf32> to vector<1x4xf32>
      %c4_i32_293 = arith.constant 4 : i32
      %414 = arith.addi %354, %c4_i32_293 : i32
      %c0_294 = arith.constant 0 : index
      %c0_295 = arith.constant 0 : index
      %415 = arith.index_cast %414 : i32 to index
      %416 = memref.load %arg3[%c0_294, %c0_295, %415] : memref<1x1x1024xi32, #tpu.memory_space<smem>>
      %c0_296 = arith.constant 0 : index
      %417 = arith.index_cast %416 : i32 to index
      %c0_297 = arith.constant 0 : index
      %418 = vector.load %arg4[%c0_296, %417, %c0_297] : memref<1x128x4xf32, #tpu.memory_space<vmem>>, vector<1x1x4xf32>
      %419 = vector.shape_cast %418 : vector<1x1x4xf32> to vector<1x4xf32>
      %420 = arith.subf %413, %419 : vector<1x4xf32>
      %421 = arith.maximumf %407, %420 : vector<1x4xf32>
      %c5_i32_298 = arith.constant 5 : i32
      %422 = arith.addi %354, %c5_i32_298 : i32
      %c0_299 = arith.constant 0 : index
      %c0_300 = arith.constant 0 : index
      %423 = arith.index_cast %422 : i32 to index
      %424 = memref.load %arg2[%c0_299, %c0_300, %423] : memref<1x1x1024xi32, #tpu.memory_space<smem>>
      %c0_301 = arith.constant 0 : index
      %425 = arith.index_cast %424 : i32 to index
      %c0_302 = arith.constant 0 : index
      %426 = vector.load %arg4[%c0_301, %425, %c0_302] : memref<1x128x4xf32, #tpu.memory_space<vmem>>, vector<1x1x4xf32>
      %427 = vector.shape_cast %426 : vector<1x1x4xf32> to vector<1x4xf32>
      %c5_i32_303 = arith.constant 5 : i32
      %428 = arith.addi %354, %c5_i32_303 : i32
      %c0_304 = arith.constant 0 : index
      %c0_305 = arith.constant 0 : index
      %429 = arith.index_cast %428 : i32 to index
      %430 = memref.load %arg3[%c0_304, %c0_305, %429] : memref<1x1x1024xi32, #tpu.memory_space<smem>>
      %c0_306 = arith.constant 0 : index
      %431 = arith.index_cast %430 : i32 to index
      %c0_307 = arith.constant 0 : index
      %432 = vector.load %arg4[%c0_306, %431, %c0_307] : memref<1x128x4xf32, #tpu.memory_space<vmem>>, vector<1x1x4xf32>
      %433 = vector.shape_cast %432 : vector<1x1x4xf32> to vector<1x4xf32>
      %434 = arith.subf %427, %433 : vector<1x4xf32>
      %435 = arith.maximumf %421, %434 : vector<1x4xf32>
      %c6_i32_308 = arith.constant 6 : i32
      %436 = arith.addi %354, %c6_i32_308 : i32
      %c0_309 = arith.constant 0 : index
      %c0_310 = arith.constant 0 : index
      %437 = arith.index_cast %436 : i32 to index
      %438 = memref.load %arg2[%c0_309, %c0_310, %437] : memref<1x1x1024xi32, #tpu.memory_space<smem>>
      %c0_311 = arith.constant 0 : index
      %439 = arith.index_cast %438 : i32 to index
      %c0_312 = arith.constant 0 : index
      %440 = vector.load %arg4[%c0_311, %439, %c0_312] : memref<1x128x4xf32, #tpu.memory_space<vmem>>, vector<1x1x4xf32>
      %441 = vector.shape_cast %440 : vector<1x1x4xf32> to vector<1x4xf32>
      %c6_i32_313 = arith.constant 6 : i32
      %442 = arith.addi %354, %c6_i32_313 : i32
      %c0_314 = arith.constant 0 : index
      %c0_315 = arith.constant 0 : index
      %443 = arith.index_cast %442 : i32 to index
      %444 = memref.load %arg3[%c0_314, %c0_315, %443] : memref<1x1x1024xi32, #tpu.memory_space<smem>>
      %c0_316 = arith.constant 0 : index
      %445 = arith.index_cast %444 : i32 to index
      %c0_317 = arith.constant 0 : index
      %446 = vector.load %arg4[%c0_316, %445, %c0_317] : memref<1x128x4xf32, #tpu.memory_space<vmem>>, vector<1x1x4xf32>
      %447 = vector.shape_cast %446 : vector<1x1x4xf32> to vector<1x4xf32>
      %448 = arith.subf %441, %447 : vector<1x4xf32>
      %449 = arith.maximumf %435, %448 : vector<1x4xf32>
      %c7_i32_318 = arith.constant 7 : i32
      %450 = arith.addi %354, %c7_i32_318 : i32
      %c0_319 = arith.constant 0 : index
      %c0_320 = arith.constant 0 : index
      %451 = arith.index_cast %450 : i32 to index
      %452 = memref.load %arg2[%c0_319, %c0_320, %451] : memref<1x1x1024xi32, #tpu.memory_space<smem>>
      %c0_321 = arith.constant 0 : index
      %453 = arith.index_cast %452 : i32 to index
      %c0_322 = arith.constant 0 : index
      %454 = vector.load %arg4[%c0_321, %453, %c0_322] : memref<1x128x4xf32, #tpu.memory_space<vmem>>, vector<1x1x4xf32>
      %455 = vector.shape_cast %454 : vector<1x1x4xf32> to vector<1x4xf32>
      %c7_i32_323 = arith.constant 7 : i32
      %456 = arith.addi %354, %c7_i32_323 : i32
      %c0_324 = arith.constant 0 : index
      %c0_325 = arith.constant 0 : index
      %457 = arith.index_cast %456 : i32 to index
      %458 = memref.load %arg3[%c0_324, %c0_325, %457] : memref<1x1x1024xi32, #tpu.memory_space<smem>>
      %c0_326 = arith.constant 0 : index
      %459 = arith.index_cast %458 : i32 to index
      %c0_327 = arith.constant 0 : index
      %460 = vector.load %arg4[%c0_326, %459, %c0_327] : memref<1x128x4xf32, #tpu.memory_space<vmem>>, vector<1x1x4xf32>
      %461 = vector.shape_cast %460 : vector<1x1x4xf32> to vector<1x4xf32>
      %462 = arith.subf %455, %461 : vector<1x4xf32>
      %463 = arith.maximumf %449, %462 : vector<1x4xf32>
      %c4_i32_328 = arith.constant 4 : i32
      %464 = arith.addi %19, %c4_i32_328 : i32
      %c8_i32_329 = arith.constant 8 : i32
      %465 = arith.muli %464, %c8_i32_329 : i32
      %c0_330 = arith.constant 0 : index
      %c0_331 = arith.constant 0 : index
      %466 = arith.index_cast %465 : i32 to index
      %467 = memref.load %arg2[%c0_330, %c0_331, %466] : memref<1x1x1024xi32, #tpu.memory_space<smem>>
      %c0_332 = arith.constant 0 : index
      %468 = arith.index_cast %467 : i32 to index
      %c0_333 = arith.constant 0 : index
      %469 = vector.load %arg4[%c0_332, %468, %c0_333] : memref<1x128x4xf32, #tpu.memory_space<vmem>>, vector<1x1x4xf32>
      %470 = vector.shape_cast %469 : vector<1x1x4xf32> to vector<1x4xf32>
      %c0_334 = arith.constant 0 : index
      %c0_335 = arith.constant 0 : index
      %471 = arith.index_cast %465 : i32 to index
      %472 = memref.load %arg3[%c0_334, %c0_335, %471] : memref<1x1x1024xi32, #tpu.memory_space<smem>>
      %c0_336 = arith.constant 0 : index
      %473 = arith.index_cast %472 : i32 to index
      %c0_337 = arith.constant 0 : index
      %474 = vector.load %arg4[%c0_336, %473, %c0_337] : memref<1x128x4xf32, #tpu.memory_space<vmem>>, vector<1x1x4xf32>
      %475 = vector.shape_cast %474 : vector<1x1x4xf32> to vector<1x4xf32>
      %476 = arith.subf %470, %475 : vector<1x4xf32>
      %c1_i32_338 = arith.constant 1 : i32
      %477 = arith.addi %465, %c1_i32_338 : i32
      %c0_339 = arith.constant 0 : index
      %c0_340 = arith.constant 0 : index
      %478 = arith.index_cast %477 : i32 to index
      %479 = memref.load %arg2[%c0_339, %c0_340, %478] : memref<1x1x1024xi32, #tpu.memory_space<smem>>
      %c0_341 = arith.constant 0 : index
      %480 = arith.index_cast %479 : i32 to index
      %c0_342 = arith.constant 0 : index
      %481 = vector.load %arg4[%c0_341, %480, %c0_342] : memref<1x128x4xf32, #tpu.memory_space<vmem>>, vector<1x1x4xf32>
      %482 = vector.shape_cast %481 : vector<1x1x4xf32> to vector<1x4xf32>
      %c1_i32_343 = arith.constant 1 : i32
      %483 = arith.addi %465, %c1_i32_343 : i32
      %c0_344 = arith.constant 0 : index
      %c0_345 = arith.constant 0 : index
      %484 = arith.index_cast %483 : i32 to index
      %485 = memref.load %arg3[%c0_344, %c0_345, %484] : memref<1x1x1024xi32, #tpu.memory_space<smem>>
      %c0_346 = arith.constant 0 : index
      %486 = arith.index_cast %485 : i32 to index
      %c0_347 = arith.constant 0 : index
      %487 = vector.load %arg4[%c0_346, %486, %c0_347] : memref<1x128x4xf32, #tpu.memory_space<vmem>>, vector<1x1x4xf32>
      %488 = vector.shape_cast %487 : vector<1x1x4xf32> to vector<1x4xf32>
      %489 = arith.subf %482, %488 : vector<1x4xf32>
      %490 = arith.maximumf %476, %489 : vector<1x4xf32>
      %c2_i32_348 = arith.constant 2 : i32
      %491 = arith.addi %465, %c2_i32_348 : i32
      %c0_349 = arith.constant 0 : index
      %c0_350 = arith.constant 0 : index
      %492 = arith.index_cast %491 : i32 to index
      %493 = memref.load %arg2[%c0_349, %c0_350, %492] : memref<1x1x1024xi32, #tpu.memory_space<smem>>
      %c0_351 = arith.constant 0 : index
      %494 = arith.index_cast %493 : i32 to index
      %c0_352 = arith.constant 0 : index
      %495 = vector.load %arg4[%c0_351, %494, %c0_352] : memref<1x128x4xf32, #tpu.memory_space<vmem>>, vector<1x1x4xf32>
      %496 = vector.shape_cast %495 : vector<1x1x4xf32> to vector<1x4xf32>
      %c2_i32_353 = arith.constant 2 : i32
      %497 = arith.addi %465, %c2_i32_353 : i32
      %c0_354 = arith.constant 0 : index
      %c0_355 = arith.constant 0 : index
      %498 = arith.index_cast %497 : i32 to index
      %499 = memref.load %arg3[%c0_354, %c0_355, %498] : memref<1x1x1024xi32, #tpu.memory_space<smem>>
      %c0_356 = arith.constant 0 : index
      %500 = arith.index_cast %499 : i32 to index
      %c0_357 = arith.constant 0 : index
      %501 = vector.load %arg4[%c0_356, %500, %c0_357] : memref<1x128x4xf32, #tpu.memory_space<vmem>>, vector<1x1x4xf32>
      %502 = vector.shape_cast %501 : vector<1x1x4xf32> to vector<1x4xf32>
      %503 = arith.subf %496, %502 : vector<1x4xf32>
      %504 = arith.maximumf %490, %503 : vector<1x4xf32>
      %c3_i32_358 = arith.constant 3 : i32
      %505 = arith.addi %465, %c3_i32_358 : i32
      %c0_359 = arith.constant 0 : index
      %c0_360 = arith.constant 0 : index
      %506 = arith.index_cast %505 : i32 to index
      %507 = memref.load %arg2[%c0_359, %c0_360, %506] : memref<1x1x1024xi32, #tpu.memory_space<smem>>
      %c0_361 = arith.constant 0 : index
      %508 = arith.index_cast %507 : i32 to index
      %c0_362 = arith.constant 0 : index
      %509 = vector.load %arg4[%c0_361, %508, %c0_362] : memref<1x128x4xf32, #tpu.memory_space<vmem>>, vector<1x1x4xf32>
      %510 = vector.shape_cast %509 : vector<1x1x4xf32> to vector<1x4xf32>
      %c3_i32_363 = arith.constant 3 : i32
      %511 = arith.addi %465, %c3_i32_363 : i32
      %c0_364 = arith.constant 0 : index
      %c0_365 = arith.constant 0 : index
      %512 = arith.index_cast %511 : i32 to index
      %513 = memref.load %arg3[%c0_364, %c0_365, %512] : memref<1x1x1024xi32, #tpu.memory_space<smem>>
      %c0_366 = arith.constant 0 : index
      %514 = arith.index_cast %513 : i32 to index
      %c0_367 = arith.constant 0 : index
      %515 = vector.load %arg4[%c0_366, %514, %c0_367] : memref<1x128x4xf32, #tpu.memory_space<vmem>>, vector<1x1x4xf32>
      %516 = vector.shape_cast %515 : vector<1x1x4xf32> to vector<1x4xf32>
      %517 = arith.subf %510, %516 : vector<1x4xf32>
      %518 = arith.maximumf %504, %517 : vector<1x4xf32>
      %c4_i32_368 = arith.constant 4 : i32
      %519 = arith.addi %465, %c4_i32_368 : i32
      %c0_369 = arith.constant 0 : index
      %c0_370 = arith.constant 0 : index
      %520 = arith.index_cast %519 : i32 to index
      %521 = memref.load %arg2[%c0_369, %c0_370, %520] : memref<1x1x1024xi32, #tpu.memory_space<smem>>
      %c0_371 = arith.constant 0 : index
      %522 = arith.index_cast %521 : i32 to index
      %c0_372 = arith.constant 0 : index
      %523 = vector.load %arg4[%c0_371, %522, %c0_372] : memref<1x128x4xf32, #tpu.memory_space<vmem>>, vector<1x1x4xf32>
      %524 = vector.shape_cast %523 : vector<1x1x4xf32> to vector<1x4xf32>
      %c4_i32_373 = arith.constant 4 : i32
      %525 = arith.addi %465, %c4_i32_373 : i32
      %c0_374 = arith.constant 0 : index
      %c0_375 = arith.constant 0 : index
      %526 = arith.index_cast %525 : i32 to index
      %527 = memref.load %arg3[%c0_374, %c0_375, %526] : memref<1x1x1024xi32, #tpu.memory_space<smem>>
      %c0_376 = arith.constant 0 : index
      %528 = arith.index_cast %527 : i32 to index
      %c0_377 = arith.constant 0 : index
      %529 = vector.load %arg4[%c0_376, %528, %c0_377] : memref<1x128x4xf32, #tpu.memory_space<vmem>>, vector<1x1x4xf32>
      %530 = vector.shape_cast %529 : vector<1x1x4xf32> to vector<1x4xf32>
      %531 = arith.subf %524, %530 : vector<1x4xf32>
      %532 = arith.maximumf %518, %531 : vector<1x4xf32>
      %c5_i32_378 = arith.constant 5 : i32
      %533 = arith.addi %465, %c5_i32_378 : i32
      %c0_379 = arith.constant 0 : index
      %c0_380 = arith.constant 0 : index
      %534 = arith.index_cast %533 : i32 to index
      %535 = memref.load %arg2[%c0_379, %c0_380, %534] : memref<1x1x1024xi32, #tpu.memory_space<smem>>
      %c0_381 = arith.constant 0 : index
      %536 = arith.index_cast %535 : i32 to index
      %c0_382 = arith.constant 0 : index
      %537 = vector.load %arg4[%c0_381, %536, %c0_382] : memref<1x128x4xf32, #tpu.memory_space<vmem>>, vector<1x1x4xf32>
      %538 = vector.shape_cast %537 : vector<1x1x4xf32> to vector<1x4xf32>
      %c5_i32_383 = arith.constant 5 : i32
      %539 = arith.addi %465, %c5_i32_383 : i32
      %c0_384 = arith.constant 0 : index
      %c0_385 = arith.constant 0 : index
      %540 = arith.index_cast %539 : i32 to index
      %541 = memref.load %arg3[%c0_384, %c0_385, %540] : memref<1x1x1024xi32, #tpu.memory_space<smem>>
      %c0_386 = arith.constant 0 : index
      %542 = arith.index_cast %541 : i32 to index
      %c0_387 = arith.constant 0 : index
      %543 = vector.load %arg4[%c0_386, %542, %c0_387] : memref<1x128x4xf32, #tpu.memory_space<vmem>>, vector<1x1x4xf32>
      %544 = vector.shape_cast %543 : vector<1x1x4xf32> to vector<1x4xf32>
      %545 = arith.subf %538, %544 : vector<1x4xf32>
      %546 = arith.maximumf %532, %545 : vector<1x4xf32>
      %c6_i32_388 = arith.constant 6 : i32
      %547 = arith.addi %465, %c6_i32_388 : i32
      %c0_389 = arith.constant 0 : index
      %c0_390 = arith.constant 0 : index
      %548 = arith.index_cast %547 : i32 to index
      %549 = memref.load %arg2[%c0_389, %c0_390, %548] : memref<1x1x1024xi32, #tpu.memory_space<smem>>
      %c0_391 = arith.constant 0 : index
      %550 = arith.index_cast %549 : i32 to index
      %c0_392 = arith.constant 0 : index
      %551 = vector.load %arg4[%c0_391, %550, %c0_392] : memref<1x128x4xf32, #tpu.memory_space<vmem>>, vector<1x1x4xf32>
      %552 = vector.shape_cast %551 : vector<1x1x4xf32> to vector<1x4xf32>
      %c6_i32_393 = arith.constant 6 : i32
      %553 = arith.addi %465, %c6_i32_393 : i32
      %c0_394 = arith.constant 0 : index
      %c0_395 = arith.constant 0 : index
      %554 = arith.index_cast %553 : i32 to index
      %555 = memref.load %arg3[%c0_394, %c0_395, %554] : memref<1x1x1024xi32, #tpu.memory_space<smem>>
      %c0_396 = arith.constant 0 : index
      %556 = arith.index_cast %555 : i32 to index
      %c0_397 = arith.constant 0 : index
      %557 = vector.load %arg4[%c0_396, %556, %c0_397] : memref<1x128x4xf32, #tpu.memory_space<vmem>>, vector<1x1x4xf32>
      %558 = vector.shape_cast %557 : vector<1x1x4xf32> to vector<1x4xf32>
      %559 = arith.subf %552, %558 : vector<1x4xf32>
      %560 = arith.maximumf %546, %559 : vector<1x4xf32>
      %c7_i32_398 = arith.constant 7 : i32
      %561 = arith.addi %465, %c7_i32_398 : i32
      %c0_399 = arith.constant 0 : index
      %c0_400 = arith.constant 0 : index
      %562 = arith.index_cast %561 : i32 to index
      %563 = memref.load %arg2[%c0_399, %c0_400, %562] : memref<1x1x1024xi32, #tpu.memory_space<smem>>
      %c0_401 = arith.constant 0 : index
      %564 = arith.index_cast %563 : i32 to index
      %c0_402 = arith.constant 0 : index
      %565 = vector.load %arg4[%c0_401, %564, %c0_402] : memref<1x128x4xf32, #tpu.memory_space<vmem>>, vector<1x1x4xf32>
      %566 = vector.shape_cast %565 : vector<1x1x4xf32> to vector<1x4xf32>
      %c7_i32_403 = arith.constant 7 : i32
      %567 = arith.addi %465, %c7_i32_403 : i32
      %c0_404 = arith.constant 0 : index
      %c0_405 = arith.constant 0 : index
      %568 = arith.index_cast %567 : i32 to index
      %569 = memref.load %arg3[%c0_404, %c0_405, %568] : memref<1x1x1024xi32, #tpu.memory_space<smem>>
      %c0_406 = arith.constant 0 : index
      %570 = arith.index_cast %569 : i32 to index
      %c0_407 = arith.constant 0 : index
      %571 = vector.load %arg4[%c0_406, %570, %c0_407] : memref<1x128x4xf32, #tpu.memory_space<vmem>>, vector<1x1x4xf32>
      %572 = vector.shape_cast %571 : vector<1x1x4xf32> to vector<1x4xf32>
      %573 = arith.subf %566, %572 : vector<1x4xf32>
      %574 = arith.maximumf %560, %573 : vector<1x4xf32>
      %c5_i32_408 = arith.constant 5 : i32
      %575 = arith.addi %19, %c5_i32_408 : i32
      %c8_i32_409 = arith.constant 8 : i32
      %576 = arith.muli %575, %c8_i32_409 : i32
      %c0_410 = arith.constant 0 : index
      %c0_411 = arith.constant 0 : index
      %577 = arith.index_cast %576 : i32 to index
      %578 = memref.load %arg2[%c0_410, %c0_411, %577] : memref<1x1x1024xi32, #tpu.memory_space<smem>>
      %c0_412 = arith.constant 0 : index
      %579 = arith.index_cast %578 : i32 to index
      %c0_413 = arith.constant 0 : index
      %580 = vector.load %arg4[%c0_412, %579, %c0_413] : memref<1x128x4xf32, #tpu.memory_space<vmem>>, vector<1x1x4xf32>
      %581 = vector.shape_cast %580 : vector<1x1x4xf32> to vector<1x4xf32>
      %c0_414 = arith.constant 0 : index
      %c0_415 = arith.constant 0 : index
      %582 = arith.index_cast %576 : i32 to index
      %583 = memref.load %arg3[%c0_414, %c0_415, %582] : memref<1x1x1024xi32, #tpu.memory_space<smem>>
      %c0_416 = arith.constant 0 : index
      %584 = arith.index_cast %583 : i32 to index
      %c0_417 = arith.constant 0 : index
      %585 = vector.load %arg4[%c0_416, %584, %c0_417] : memref<1x128x4xf32, #tpu.memory_space<vmem>>, vector<1x1x4xf32>
      %586 = vector.shape_cast %585 : vector<1x1x4xf32> to vector<1x4xf32>
      %587 = arith.subf %581, %586 : vector<1x4xf32>
      %c1_i32_418 = arith.constant 1 : i32
      %588 = arith.addi %576, %c1_i32_418 : i32
      %c0_419 = arith.constant 0 : index
      %c0_420 = arith.constant 0 : index
      %589 = arith.index_cast %588 : i32 to index
      %590 = memref.load %arg2[%c0_419, %c0_420, %589] : memref<1x1x1024xi32, #tpu.memory_space<smem>>
      %c0_421 = arith.constant 0 : index
      %591 = arith.index_cast %590 : i32 to index
      %c0_422 = arith.constant 0 : index
      %592 = vector.load %arg4[%c0_421, %591, %c0_422] : memref<1x128x4xf32, #tpu.memory_space<vmem>>, vector<1x1x4xf32>
      %593 = vector.shape_cast %592 : vector<1x1x4xf32> to vector<1x4xf32>
      %c1_i32_423 = arith.constant 1 : i32
      %594 = arith.addi %576, %c1_i32_423 : i32
      %c0_424 = arith.constant 0 : index
      %c0_425 = arith.constant 0 : index
      %595 = arith.index_cast %594 : i32 to index
      %596 = memref.load %arg3[%c0_424, %c0_425, %595] : memref<1x1x1024xi32, #tpu.memory_space<smem>>
      %c0_426 = arith.constant 0 : index
      %597 = arith.index_cast %596 : i32 to index
      %c0_427 = arith.constant 0 : index
      %598 = vector.load %arg4[%c0_426, %597, %c0_427] : memref<1x128x4xf32, #tpu.memory_space<vmem>>, vector<1x1x4xf32>
      %599 = vector.shape_cast %598 : vector<1x1x4xf32> to vector<1x4xf32>
      %600 = arith.subf %593, %599 : vector<1x4xf32>
      %601 = arith.maximumf %587, %600 : vector<1x4xf32>
      %c2_i32_428 = arith.constant 2 : i32
      %602 = arith.addi %576, %c2_i32_428 : i32
      %c0_429 = arith.constant 0 : index
      %c0_430 = arith.constant 0 : index
      %603 = arith.index_cast %602 : i32 to index
      %604 = memref.load %arg2[%c0_429, %c0_430, %603] : memref<1x1x1024xi32, #tpu.memory_space<smem>>
      %c0_431 = arith.constant 0 : index
      %605 = arith.index_cast %604 : i32 to index
      %c0_432 = arith.constant 0 : index
      %606 = vector.load %arg4[%c0_431, %605, %c0_432] : memref<1x128x4xf32, #tpu.memory_space<vmem>>, vector<1x1x4xf32>
      %607 = vector.shape_cast %606 : vector<1x1x4xf32> to vector<1x4xf32>
      %c2_i32_433 = arith.constant 2 : i32
      %608 = arith.addi %576, %c2_i32_433 : i32
      %c0_434 = arith.constant 0 : index
      %c0_435 = arith.constant 0 : index
      %609 = arith.index_cast %608 : i32 to index
      %610 = memref.load %arg3[%c0_434, %c0_435, %609] : memref<1x1x1024xi32, #tpu.memory_space<smem>>
      %c0_436 = arith.constant 0 : index
      %611 = arith.index_cast %610 : i32 to index
      %c0_437 = arith.constant 0 : index
      %612 = vector.load %arg4[%c0_436, %611, %c0_437] : memref<1x128x4xf32, #tpu.memory_space<vmem>>, vector<1x1x4xf32>
      %613 = vector.shape_cast %612 : vector<1x1x4xf32> to vector<1x4xf32>
      %614 = arith.subf %607, %613 : vector<1x4xf32>
      %615 = arith.maximumf %601, %614 : vector<1x4xf32>
      %c3_i32_438 = arith.constant 3 : i32
      %616 = arith.addi %576, %c3_i32_438 : i32
      %c0_439 = arith.constant 0 : index
      %c0_440 = arith.constant 0 : index
      %617 = arith.index_cast %616 : i32 to index
      %618 = memref.load %arg2[%c0_439, %c0_440, %617] : memref<1x1x1024xi32, #tpu.memory_space<smem>>
      %c0_441 = arith.constant 0 : index
      %619 = arith.index_cast %618 : i32 to index
      %c0_442 = arith.constant 0 : index
      %620 = vector.load %arg4[%c0_441, %619, %c0_442] : memref<1x128x4xf32, #tpu.memory_space<vmem>>, vector<1x1x4xf32>
      %621 = vector.shape_cast %620 : vector<1x1x4xf32> to vector<1x4xf32>
      %c3_i32_443 = arith.constant 3 : i32
      %622 = arith.addi %576, %c3_i32_443 : i32
      %c0_444 = arith.constant 0 : index
      %c0_445 = arith.constant 0 : index
      %623 = arith.index_cast %622 : i32 to index
      %624 = memref.load %arg3[%c0_444, %c0_445, %623] : memref<1x1x1024xi32, #tpu.memory_space<smem>>
      %c0_446 = arith.constant 0 : index
      %625 = arith.index_cast %624 : i32 to index
      %c0_447 = arith.constant 0 : index
      %626 = vector.load %arg4[%c0_446, %625, %c0_447] : memref<1x128x4xf32, #tpu.memory_space<vmem>>, vector<1x1x4xf32>
      %627 = vector.shape_cast %626 : vector<1x1x4xf32> to vector<1x4xf32>
      %628 = arith.subf %621, %627 : vector<1x4xf32>
      %629 = arith.maximumf %615, %628 : vector<1x4xf32>
      %c4_i32_448 = arith.constant 4 : i32
      %630 = arith.addi %576, %c4_i32_448 : i32
      %c0_449 = arith.constant 0 : index
      %c0_450 = arith.constant 0 : index
      %631 = arith.index_cast %630 : i32 to index
      %632 = memref.load %arg2[%c0_449, %c0_450, %631] : memref<1x1x1024xi32, #tpu.memory_space<smem>>
      %c0_451 = arith.constant 0 : index
      %633 = arith.index_cast %632 : i32 to index
      %c0_452 = arith.constant 0 : index
      %634 = vector.load %arg4[%c0_451, %633, %c0_452] : memref<1x128x4xf32, #tpu.memory_space<vmem>>, vector<1x1x4xf32>
      %635 = vector.shape_cast %634 : vector<1x1x4xf32> to vector<1x4xf32>
      %c4_i32_453 = arith.constant 4 : i32
      %636 = arith.addi %576, %c4_i32_453 : i32
      %c0_454 = arith.constant 0 : index
      %c0_455 = arith.constant 0 : index
      %637 = arith.index_cast %636 : i32 to index
      %638 = memref.load %arg3[%c0_454, %c0_455, %637] : memref<1x1x1024xi32, #tpu.memory_space<smem>>
      %c0_456 = arith.constant 0 : index
      %639 = arith.index_cast %638 : i32 to index
      %c0_457 = arith.constant 0 : index
      %640 = vector.load %arg4[%c0_456, %639, %c0_457] : memref<1x128x4xf32, #tpu.memory_space<vmem>>, vector<1x1x4xf32>
      %641 = vector.shape_cast %640 : vector<1x1x4xf32> to vector<1x4xf32>
      %642 = arith.subf %635, %641 : vector<1x4xf32>
      %643 = arith.maximumf %629, %642 : vector<1x4xf32>
      %c5_i32_458 = arith.constant 5 : i32
      %644 = arith.addi %576, %c5_i32_458 : i32
      %c0_459 = arith.constant 0 : index
      %c0_460 = arith.constant 0 : index
      %645 = arith.index_cast %644 : i32 to index
      %646 = memref.load %arg2[%c0_459, %c0_460, %645] : memref<1x1x1024xi32, #tpu.memory_space<smem>>
      %c0_461 = arith.constant 0 : index
      %647 = arith.index_cast %646 : i32 to index
      %c0_462 = arith.constant 0 : index
      %648 = vector.load %arg4[%c0_461, %647, %c0_462] : memref<1x128x4xf32, #tpu.memory_space<vmem>>, vector<1x1x4xf32>
      %649 = vector.shape_cast %648 : vector<1x1x4xf32> to vector<1x4xf32>
      %c5_i32_463 = arith.constant 5 : i32
      %650 = arith.addi %576, %c5_i32_463 : i32
      %c0_464 = arith.constant 0 : index
      %c0_465 = arith.constant 0 : index
      %651 = arith.index_cast %650 : i32 to index
      %652 = memref.load %arg3[%c0_464, %c0_465, %651] : memref<1x1x1024xi32, #tpu.memory_space<smem>>
      %c0_466 = arith.constant 0 : index
      %653 = arith.index_cast %652 : i32 to index
      %c0_467 = arith.constant 0 : index
      %654 = vector.load %arg4[%c0_466, %653, %c0_467] : memref<1x128x4xf32, #tpu.memory_space<vmem>>, vector<1x1x4xf32>
      %655 = vector.shape_cast %654 : vector<1x1x4xf32> to vector<1x4xf32>
      %656 = arith.subf %649, %655 : vector<1x4xf32>
      %657 = arith.maximumf %643, %656 : vector<1x4xf32>
      %c6_i32_468 = arith.constant 6 : i32
      %658 = arith.addi %576, %c6_i32_468 : i32
      %c0_469 = arith.constant 0 : index
      %c0_470 = arith.constant 0 : index
      %659 = arith.index_cast %658 : i32 to index
      %660 = memref.load %arg2[%c0_469, %c0_470, %659] : memref<1x1x1024xi32, #tpu.memory_space<smem>>
      %c0_471 = arith.constant 0 : index
      %661 = arith.index_cast %660 : i32 to index
      %c0_472 = arith.constant 0 : index
      %662 = vector.load %arg4[%c0_471, %661, %c0_472] : memref<1x128x4xf32, #tpu.memory_space<vmem>>, vector<1x1x4xf32>
      %663 = vector.shape_cast %662 : vector<1x1x4xf32> to vector<1x4xf32>
      %c6_i32_473 = arith.constant 6 : i32
      %664 = arith.addi %576, %c6_i32_473 : i32
      %c0_474 = arith.constant 0 : index
      %c0_475 = arith.constant 0 : index
      %665 = arith.index_cast %664 : i32 to index
      %666 = memref.load %arg3[%c0_474, %c0_475, %665] : memref<1x1x1024xi32, #tpu.memory_space<smem>>
      %c0_476 = arith.constant 0 : index
      %667 = arith.index_cast %666 : i32 to index
      %c0_477 = arith.constant 0 : index
      %668 = vector.load %arg4[%c0_476, %667, %c0_477] : memref<1x128x4xf32, #tpu.memory_space<vmem>>, vector<1x1x4xf32>
      %669 = vector.shape_cast %668 : vector<1x1x4xf32> to vector<1x4xf32>
      %670 = arith.subf %663, %669 : vector<1x4xf32>
      %671 = arith.maximumf %657, %670 : vector<1x4xf32>
      %c7_i32_478 = arith.constant 7 : i32
      %672 = arith.addi %576, %c7_i32_478 : i32
      %c0_479 = arith.constant 0 : index
      %c0_480 = arith.constant 0 : index
      %673 = arith.index_cast %672 : i32 to index
      %674 = memref.load %arg2[%c0_479, %c0_480, %673] : memref<1x1x1024xi32, #tpu.memory_space<smem>>
      %c0_481 = arith.constant 0 : index
      %675 = arith.index_cast %674 : i32 to index
      %c0_482 = arith.constant 0 : index
      %676 = vector.load %arg4[%c0_481, %675, %c0_482] : memref<1x128x4xf32, #tpu.memory_space<vmem>>, vector<1x1x4xf32>
      %677 = vector.shape_cast %676 : vector<1x1x4xf32> to vector<1x4xf32>
      %c7_i32_483 = arith.constant 7 : i32
      %678 = arith.addi %576, %c7_i32_483 : i32
      %c0_484 = arith.constant 0 : index
      %c0_485 = arith.constant 0 : index
      %679 = arith.index_cast %678 : i32 to index
      %680 = memref.load %arg3[%c0_484, %c0_485, %679] : memref<1x1x1024xi32, #tpu.memory_space<smem>>
      %c0_486 = arith.constant 0 : index
      %681 = arith.index_cast %680 : i32 to index
      %c0_487 = arith.constant 0 : index
      %682 = vector.load %arg4[%c0_486, %681, %c0_487] : memref<1x128x4xf32, #tpu.memory_space<vmem>>, vector<1x1x4xf32>
      %683 = vector.shape_cast %682 : vector<1x1x4xf32> to vector<1x4xf32>
      %684 = arith.subf %677, %683 : vector<1x4xf32>
      %685 = arith.maximumf %671, %684 : vector<1x4xf32>
      %c6_i32_488 = arith.constant 6 : i32
      %686 = arith.addi %19, %c6_i32_488 : i32
      %c8_i32_489 = arith.constant 8 : i32
      %687 = arith.muli %686, %c8_i32_489 : i32
      %c0_490 = arith.constant 0 : index
      %c0_491 = arith.constant 0 : index
      %688 = arith.index_cast %687 : i32 to index
      %689 = memref.load %arg2[%c0_490, %c0_491, %688] : memref<1x1x1024xi32, #tpu.memory_space<smem>>
      %c0_492 = arith.constant 0 : index
      %690 = arith.index_cast %689 : i32 to index
      %c0_493 = arith.constant 0 : index
      %691 = vector.load %arg4[%c0_492, %690, %c0_493] : memref<1x128x4xf32, #tpu.memory_space<vmem>>, vector<1x1x4xf32>
      %692 = vector.shape_cast %691 : vector<1x1x4xf32> to vector<1x4xf32>
      %c0_494 = arith.constant 0 : index
      %c0_495 = arith.constant 0 : index
      %693 = arith.index_cast %687 : i32 to index
      %694 = memref.load %arg3[%c0_494, %c0_495, %693] : memref<1x1x1024xi32, #tpu.memory_space<smem>>
      %c0_496 = arith.constant 0 : index
      %695 = arith.index_cast %694 : i32 to index
      %c0_497 = arith.constant 0 : index
      %696 = vector.load %arg4[%c0_496, %695, %c0_497] : memref<1x128x4xf32, #tpu.memory_space<vmem>>, vector<1x1x4xf32>
      %697 = vector.shape_cast %696 : vector<1x1x4xf32> to vector<1x4xf32>
      %698 = arith.subf %692, %697 : vector<1x4xf32>
      %c1_i32_498 = arith.constant 1 : i32
      %699 = arith.addi %687, %c1_i32_498 : i32
      %c0_499 = arith.constant 0 : index
      %c0_500 = arith.constant 0 : index
      %700 = arith.index_cast %699 : i32 to index
      %701 = memref.load %arg2[%c0_499, %c0_500, %700] : memref<1x1x1024xi32, #tpu.memory_space<smem>>
      %c0_501 = arith.constant 0 : index
      %702 = arith.index_cast %701 : i32 to index
      %c0_502 = arith.constant 0 : index
      %703 = vector.load %arg4[%c0_501, %702, %c0_502] : memref<1x128x4xf32, #tpu.memory_space<vmem>>, vector<1x1x4xf32>
      %704 = vector.shape_cast %703 : vector<1x1x4xf32> to vector<1x4xf32>
      %c1_i32_503 = arith.constant 1 : i32
      %705 = arith.addi %687, %c1_i32_503 : i32
      %c0_504 = arith.constant 0 : index
      %c0_505 = arith.constant 0 : index
      %706 = arith.index_cast %705 : i32 to index
      %707 = memref.load %arg3[%c0_504, %c0_505, %706] : memref<1x1x1024xi32, #tpu.memory_space<smem>>
      %c0_506 = arith.constant 0 : index
      %708 = arith.index_cast %707 : i32 to index
      %c0_507 = arith.constant 0 : index
      %709 = vector.load %arg4[%c0_506, %708, %c0_507] : memref<1x128x4xf32, #tpu.memory_space<vmem>>, vector<1x1x4xf32>
      %710 = vector.shape_cast %709 : vector<1x1x4xf32> to vector<1x4xf32>
      %711 = arith.subf %704, %710 : vector<1x4xf32>
      %712 = arith.maximumf %698, %711 : vector<1x4xf32>
      %c2_i32_508 = arith.constant 2 : i32
      %713 = arith.addi %687, %c2_i32_508 : i32
      %c0_509 = arith.constant 0 : index
      %c0_510 = arith.constant 0 : index
      %714 = arith.index_cast %713 : i32 to index
      %715 = memref.load %arg2[%c0_509, %c0_510, %714] : memref<1x1x1024xi32, #tpu.memory_space<smem>>
      %c0_511 = arith.constant 0 : index
      %716 = arith.index_cast %715 : i32 to index
      %c0_512 = arith.constant 0 : index
      %717 = vector.load %arg4[%c0_511, %716, %c0_512] : memref<1x128x4xf32, #tpu.memory_space<vmem>>, vector<1x1x4xf32>
      %718 = vector.shape_cast %717 : vector<1x1x4xf32> to vector<1x4xf32>
      %c2_i32_513 = arith.constant 2 : i32
      %719 = arith.addi %687, %c2_i32_513 : i32
      %c0_514 = arith.constant 0 : index
      %c0_515 = arith.constant 0 : index
      %720 = arith.index_cast %719 : i32 to index
      %721 = memref.load %arg3[%c0_514, %c0_515, %720] : memref<1x1x1024xi32, #tpu.memory_space<smem>>
      %c0_516 = arith.constant 0 : index
      %722 = arith.index_cast %721 : i32 to index
      %c0_517 = arith.constant 0 : index
      %723 = vector.load %arg4[%c0_516, %722, %c0_517] : memref<1x128x4xf32, #tpu.memory_space<vmem>>, vector<1x1x4xf32>
      %724 = vector.shape_cast %723 : vector<1x1x4xf32> to vector<1x4xf32>
      %725 = arith.subf %718, %724 : vector<1x4xf32>
      %726 = arith.maximumf %712, %725 : vector<1x4xf32>
      %c3_i32_518 = arith.constant 3 : i32
      %727 = arith.addi %687, %c3_i32_518 : i32
      %c0_519 = arith.constant 0 : index
      %c0_520 = arith.constant 0 : index
      %728 = arith.index_cast %727 : i32 to index
      %729 = memref.load %arg2[%c0_519, %c0_520, %728] : memref<1x1x1024xi32, #tpu.memory_space<smem>>
      %c0_521 = arith.constant 0 : index
      %730 = arith.index_cast %729 : i32 to index
      %c0_522 = arith.constant 0 : index
      %731 = vector.load %arg4[%c0_521, %730, %c0_522] : memref<1x128x4xf32, #tpu.memory_space<vmem>>, vector<1x1x4xf32>
      %732 = vector.shape_cast %731 : vector<1x1x4xf32> to vector<1x4xf32>
      %c3_i32_523 = arith.constant 3 : i32
      %733 = arith.addi %687, %c3_i32_523 : i32
      %c0_524 = arith.constant 0 : index
      %c0_525 = arith.constant 0 : index
      %734 = arith.index_cast %733 : i32 to index
      %735 = memref.load %arg3[%c0_524, %c0_525, %734] : memref<1x1x1024xi32, #tpu.memory_space<smem>>
      %c0_526 = arith.constant 0 : index
      %736 = arith.index_cast %735 : i32 to index
      %c0_527 = arith.constant 0 : index
      %737 = vector.load %arg4[%c0_526, %736, %c0_527] : memref<1x128x4xf32, #tpu.memory_space<vmem>>, vector<1x1x4xf32>
      %738 = vector.shape_cast %737 : vector<1x1x4xf32> to vector<1x4xf32>
      %739 = arith.subf %732, %738 : vector<1x4xf32>
      %740 = arith.maximumf %726, %739 : vector<1x4xf32>
      %c4_i32_528 = arith.constant 4 : i32
      %741 = arith.addi %687, %c4_i32_528 : i32
      %c0_529 = arith.constant 0 : index
      %c0_530 = arith.constant 0 : index
      %742 = arith.index_cast %741 : i32 to index
      %743 = memref.load %arg2[%c0_529, %c0_530, %742] : memref<1x1x1024xi32, #tpu.memory_space<smem>>
      %c0_531 = arith.constant 0 : index
      %744 = arith.index_cast %743 : i32 to index
      %c0_532 = arith.constant 0 : index
      %745 = vector.load %arg4[%c0_531, %744, %c0_532] : memref<1x128x4xf32, #tpu.memory_space<vmem>>, vector<1x1x4xf32>
      %746 = vector.shape_cast %745 : vector<1x1x4xf32> to vector<1x4xf32>
      %c4_i32_533 = arith.constant 4 : i32
      %747 = arith.addi %687, %c4_i32_533 : i32
      %c0_534 = arith.constant 0 : index
      %c0_535 = arith.constant 0 : index
      %748 = arith.index_cast %747 : i32 to index
      %749 = memref.load %arg3[%c0_534, %c0_535, %748] : memref<1x1x1024xi32, #tpu.memory_space<smem>>
      %c0_536 = arith.constant 0 : index
      %750 = arith.index_cast %749 : i32 to index
      %c0_537 = arith.constant 0 : index
      %751 = vector.load %arg4[%c0_536, %750, %c0_537] : memref<1x128x4xf32, #tpu.memory_space<vmem>>, vector<1x1x4xf32>
      %752 = vector.shape_cast %751 : vector<1x1x4xf32> to vector<1x4xf32>
      %753 = arith.subf %746, %752 : vector<1x4xf32>
      %754 = arith.maximumf %740, %753 : vector<1x4xf32>
      %c5_i32_538 = arith.constant 5 : i32
      %755 = arith.addi %687, %c5_i32_538 : i32
      %c0_539 = arith.constant 0 : index
      %c0_540 = arith.constant 0 : index
      %756 = arith.index_cast %755 : i32 to index
      %757 = memref.load %arg2[%c0_539, %c0_540, %756] : memref<1x1x1024xi32, #tpu.memory_space<smem>>
      %c0_541 = arith.constant 0 : index
      %758 = arith.index_cast %757 : i32 to index
      %c0_542 = arith.constant 0 : index
      %759 = vector.load %arg4[%c0_541, %758, %c0_542] : memref<1x128x4xf32, #tpu.memory_space<vmem>>, vector<1x1x4xf32>
      %760 = vector.shape_cast %759 : vector<1x1x4xf32> to vector<1x4xf32>
      %c5_i32_543 = arith.constant 5 : i32
      %761 = arith.addi %687, %c5_i32_543 : i32
      %c0_544 = arith.constant 0 : index
      %c0_545 = arith.constant 0 : index
      %762 = arith.index_cast %761 : i32 to index
      %763 = memref.load %arg3[%c0_544, %c0_545, %762] : memref<1x1x1024xi32, #tpu.memory_space<smem>>
      %c0_546 = arith.constant 0 : index
      %764 = arith.index_cast %763 : i32 to index
      %c0_547 = arith.constant 0 : index
      %765 = vector.load %arg4[%c0_546, %764, %c0_547] : memref<1x128x4xf32, #tpu.memory_space<vmem>>, vector<1x1x4xf32>
      %766 = vector.shape_cast %765 : vector<1x1x4xf32> to vector<1x4xf32>
      %767 = arith.subf %760, %766 : vector<1x4xf32>
      %768 = arith.maximumf %754, %767 : vector<1x4xf32>
      %c6_i32_548 = arith.constant 6 : i32
      %769 = arith.addi %687, %c6_i32_548 : i32
      %c0_549 = arith.constant 0 : index
      %c0_550 = arith.constant 0 : index
      %770 = arith.index_cast %769 : i32 to index
      %771 = memref.load %arg2[%c0_549, %c0_550, %770] : memref<1x1x1024xi32, #tpu.memory_space<smem>>
      %c0_551 = arith.constant 0 : index
      %772 = arith.index_cast %771 : i32 to index
      %c0_552 = arith.constant 0 : index
      %773 = vector.load %arg4[%c0_551, %772, %c0_552] : memref<1x128x4xf32, #tpu.memory_space<vmem>>, vector<1x1x4xf32>
      %774 = vector.shape_cast %773 : vector<1x1x4xf32> to vector<1x4xf32>
      %c6_i32_553 = arith.constant 6 : i32
      %775 = arith.addi %687, %c6_i32_553 : i32
      %c0_554 = arith.constant 0 : index
      %c0_555 = arith.constant 0 : index
      %776 = arith.index_cast %775 : i32 to index
      %777 = memref.load %arg3[%c0_554, %c0_555, %776] : memref<1x1x1024xi32, #tpu.memory_space<smem>>
      %c0_556 = arith.constant 0 : index
      %778 = arith.index_cast %777 : i32 to index
      %c0_557 = arith.constant 0 : index
      %779 = vector.load %arg4[%c0_556, %778, %c0_557] : memref<1x128x4xf32, #tpu.memory_space<vmem>>, vector<1x1x4xf32>
      %780 = vector.shape_cast %779 : vector<1x1x4xf32> to vector<1x4xf32>
      %781 = arith.subf %774, %780 : vector<1x4xf32>
      %782 = arith.maximumf %768, %781 : vector<1x4xf32>
      %c7_i32_558 = arith.constant 7 : i32
      %783 = arith.addi %687, %c7_i32_558 : i32
      %c0_559 = arith.constant 0 : index
      %c0_560 = arith.constant 0 : index
      %784 = arith.index_cast %783 : i32 to index
      %785 = memref.load %arg2[%c0_559, %c0_560, %784] : memref<1x1x1024xi32, #tpu.memory_space<smem>>
      %c0_561 = arith.constant 0 : index
      %786 = arith.index_cast %785 : i32 to index
      %c0_562 = arith.constant 0 : index
      %787 = vector.load %arg4[%c0_561, %786, %c0_562] : memref<1x128x4xf32, #tpu.memory_space<vmem>>, vector<1x1x4xf32>
      %788 = vector.shape_cast %787 : vector<1x1x4xf32> to vector<1x4xf32>
      %c7_i32_563 = arith.constant 7 : i32
      %789 = arith.addi %687, %c7_i32_563 : i32
      %c0_564 = arith.constant 0 : index
      %c0_565 = arith.constant 0 : index
      %790 = arith.index_cast %789 : i32 to index
      %791 = memref.load %arg3[%c0_564, %c0_565, %790] : memref<1x1x1024xi32, #tpu.memory_space<smem>>
      %c0_566 = arith.constant 0 : index
      %792 = arith.index_cast %791 : i32 to index
      %c0_567 = arith.constant 0 : index
      %793 = vector.load %arg4[%c0_566, %792, %c0_567] : memref<1x128x4xf32, #tpu.memory_space<vmem>>, vector<1x1x4xf32>
      %794 = vector.shape_cast %793 : vector<1x1x4xf32> to vector<1x4xf32>
      %795 = arith.subf %788, %794 : vector<1x4xf32>
      %796 = arith.maximumf %782, %795 : vector<1x4xf32>
      %c7_i32_568 = arith.constant 7 : i32
      %797 = arith.addi %19, %c7_i32_568 : i32
      %c8_i32_569 = arith.constant 8 : i32
      %798 = arith.muli %797, %c8_i32_569 : i32
      %c0_570 = arith.constant 0 : index
      %c0_571 = arith.constant 0 : index
      %799 = arith.index_cast %798 : i32 to index
      %800 = memref.load %arg2[%c0_570, %c0_571, %799] : memref<1x1x1024xi32, #tpu.memory_space<smem>>
      %c0_572 = arith.constant 0 : index
      %801 = arith.index_cast %800 : i32 to index
      %c0_573 = arith.constant 0 : index
      %802 = vector.load %arg4[%c0_572, %801, %c0_573] : memref<1x128x4xf32, #tpu.memory_space<vmem>>, vector<1x1x4xf32>
      %803 = vector.shape_cast %802 : vector<1x1x4xf32> to vector<1x4xf32>
      %c0_574 = arith.constant 0 : index
      %c0_575 = arith.constant 0 : index
      %804 = arith.index_cast %798 : i32 to index
      %805 = memref.load %arg3[%c0_574, %c0_575, %804] : memref<1x1x1024xi32, #tpu.memory_space<smem>>
      %c0_576 = arith.constant 0 : index
      %806 = arith.index_cast %805 : i32 to index
      %c0_577 = arith.constant 0 : index
      %807 = vector.load %arg4[%c0_576, %806, %c0_577] : memref<1x128x4xf32, #tpu.memory_space<vmem>>, vector<1x1x4xf32>
      %808 = vector.shape_cast %807 : vector<1x1x4xf32> to vector<1x4xf32>
      %809 = arith.subf %803, %808 : vector<1x4xf32>
      %c1_i32_578 = arith.constant 1 : i32
      %810 = arith.addi %798, %c1_i32_578 : i32
      %c0_579 = arith.constant 0 : index
      %c0_580 = arith.constant 0 : index
      %811 = arith.index_cast %810 : i32 to index
      %812 = memref.load %arg2[%c0_579, %c0_580, %811] : memref<1x1x1024xi32, #tpu.memory_space<smem>>
      %c0_581 = arith.constant 0 : index
      %813 = arith.index_cast %812 : i32 to index
      %c0_582 = arith.constant 0 : index
      %814 = vector.load %arg4[%c0_581, %813, %c0_582] : memref<1x128x4xf32, #tpu.memory_space<vmem>>, vector<1x1x4xf32>
      %815 = vector.shape_cast %814 : vector<1x1x4xf32> to vector<1x4xf32>
      %c1_i32_583 = arith.constant 1 : i32
      %816 = arith.addi %798, %c1_i32_583 : i32
      %c0_584 = arith.constant 0 : index
      %c0_585 = arith.constant 0 : index
      %817 = arith.index_cast %816 : i32 to index
      %818 = memref.load %arg3[%c0_584, %c0_585, %817] : memref<1x1x1024xi32, #tpu.memory_space<smem>>
      %c0_586 = arith.constant 0 : index
      %819 = arith.index_cast %818 : i32 to index
      %c0_587 = arith.constant 0 : index
      %820 = vector.load %arg4[%c0_586, %819, %c0_587] : memref<1x128x4xf32, #tpu.memory_space<vmem>>, vector<1x1x4xf32>
      %821 = vector.shape_cast %820 : vector<1x1x4xf32> to vector<1x4xf32>
      %822 = arith.subf %815, %821 : vector<1x4xf32>
      %823 = arith.maximumf %809, %822 : vector<1x4xf32>
      %c2_i32_588 = arith.constant 2 : i32
      %824 = arith.addi %798, %c2_i32_588 : i32
      %c0_589 = arith.constant 0 : index
      %c0_590 = arith.constant 0 : index
      %825 = arith.index_cast %824 : i32 to index
      %826 = memref.load %arg2[%c0_589, %c0_590, %825] : memref<1x1x1024xi32, #tpu.memory_space<smem>>
      %c0_591 = arith.constant 0 : index
      %827 = arith.index_cast %826 : i32 to index
      %c0_592 = arith.constant 0 : index
      %828 = vector.load %arg4[%c0_591, %827, %c0_592] : memref<1x128x4xf32, #tpu.memory_space<vmem>>, vector<1x1x4xf32>
      %829 = vector.shape_cast %828 : vector<1x1x4xf32> to vector<1x4xf32>
      %c2_i32_593 = arith.constant 2 : i32
      %830 = arith.addi %798, %c2_i32_593 : i32
      %c0_594 = arith.constant 0 : index
      %c0_595 = arith.constant 0 : index
      %831 = arith.index_cast %830 : i32 to index
      %832 = memref.load %arg3[%c0_594, %c0_595, %831] : memref<1x1x1024xi32, #tpu.memory_space<smem>>
      %c0_596 = arith.constant 0 : index
      %833 = arith.index_cast %832 : i32 to index
      %c0_597 = arith.constant 0 : index
      %834 = vector.load %arg4[%c0_596, %833, %c0_597] : memref<1x128x4xf32, #tpu.memory_space<vmem>>, vector<1x1x4xf32>
      %835 = vector.shape_cast %834 : vector<1x1x4xf32> to vector<1x4xf32>
      %836 = arith.subf %829, %835 : vector<1x4xf32>
      %837 = arith.maximumf %823, %836 : vector<1x4xf32>
      %c3_i32_598 = arith.constant 3 : i32
      %838 = arith.addi %798, %c3_i32_598 : i32
      %c0_599 = arith.constant 0 : index
      %c0_600 = arith.constant 0 : index
      %839 = arith.index_cast %838 : i32 to index
      %840 = memref.load %arg2[%c0_599, %c0_600, %839] : memref<1x1x1024xi32, #tpu.memory_space<smem>>
      %c0_601 = arith.constant 0 : index
      %841 = arith.index_cast %840 : i32 to index
      %c0_602 = arith.constant 0 : index
      %842 = vector.load %arg4[%c0_601, %841, %c0_602] : memref<1x128x4xf32, #tpu.memory_space<vmem>>, vector<1x1x4xf32>
      %843 = vector.shape_cast %842 : vector<1x1x4xf32> to vector<1x4xf32>
      %c3_i32_603 = arith.constant 3 : i32
      %844 = arith.addi %798, %c3_i32_603 : i32
      %c0_604 = arith.constant 0 : index
      %c0_605 = arith.constant 0 : index
      %845 = arith.index_cast %844 : i32 to index
      %846 = memref.load %arg3[%c0_604, %c0_605, %845] : memref<1x1x1024xi32, #tpu.memory_space<smem>>
      %c0_606 = arith.constant 0 : index
      %847 = arith.index_cast %846 : i32 to index
      %c0_607 = arith.constant 0 : index
      %848 = vector.load %arg4[%c0_606, %847, %c0_607] : memref<1x128x4xf32, #tpu.memory_space<vmem>>, vector<1x1x4xf32>
      %849 = vector.shape_cast %848 : vector<1x1x4xf32> to vector<1x4xf32>
      %850 = arith.subf %843, %849 : vector<1x4xf32>
      %851 = arith.maximumf %837, %850 : vector<1x4xf32>
      %c4_i32_608 = arith.constant 4 : i32
      %852 = arith.addi %798, %c4_i32_608 : i32
      %c0_609 = arith.constant 0 : index
      %c0_610 = arith.constant 0 : index
      %853 = arith.index_cast %852 : i32 to index
      %854 = memref.load %arg2[%c0_609, %c0_610, %853] : memref<1x1x1024xi32, #tpu.memory_space<smem>>
      %c0_611 = arith.constant 0 : index
      %855 = arith.index_cast %854 : i32 to index
      %c0_612 = arith.constant 0 : index
      %856 = vector.load %arg4[%c0_611, %855, %c0_612] : memref<1x128x4xf32, #tpu.memory_space<vmem>>, vector<1x1x4xf32>
      %857 = vector.shape_cast %856 : vector<1x1x4xf32> to vector<1x4xf32>
      %c4_i32_613 = arith.constant 4 : i32
      %858 = arith.addi %798, %c4_i32_613 : i32
      %c0_614 = arith.constant 0 : index
      %c0_615 = arith.constant 0 : index
      %859 = arith.index_cast %858 : i32 to index
      %860 = memref.load %arg3[%c0_614, %c0_615, %859] : memref<1x1x1024xi32, #tpu.memory_space<smem>>
      %c0_616 = arith.constant 0 : index
      %861 = arith.index_cast %860 : i32 to index
      %c0_617 = arith.constant 0 : index
      %862 = vector.load %arg4[%c0_616, %861, %c0_617] : memref<1x128x4xf32, #tpu.memory_space<vmem>>, vector<1x1x4xf32>
      %863 = vector.shape_cast %862 : vector<1x1x4xf32> to vector<1x4xf32>
      %864 = arith.subf %857, %863 : vector<1x4xf32>
      %865 = arith.maximumf %851, %864 : vector<1x4xf32>
      %c5_i32_618 = arith.constant 5 : i32
      %866 = arith.addi %798, %c5_i32_618 : i32
      %c0_619 = arith.constant 0 : index
      %c0_620 = arith.constant 0 : index
      %867 = arith.index_cast %866 : i32 to index
      %868 = memref.load %arg2[%c0_619, %c0_620, %867] : memref<1x1x1024xi32, #tpu.memory_space<smem>>
      %c0_621 = arith.constant 0 : index
      %869 = arith.index_cast %868 : i32 to index
      %c0_622 = arith.constant 0 : index
      %870 = vector.load %arg4[%c0_621, %869, %c0_622] : memref<1x128x4xf32, #tpu.memory_space<vmem>>, vector<1x1x4xf32>
      %871 = vector.shape_cast %870 : vector<1x1x4xf32> to vector<1x4xf32>
      %c5_i32_623 = arith.constant 5 : i32
      %872 = arith.addi %798, %c5_i32_623 : i32
      %c0_624 = arith.constant 0 : index
      %c0_625 = arith.constant 0 : index
      %873 = arith.index_cast %872 : i32 to index
      %874 = memref.load %arg3[%c0_624, %c0_625, %873] : memref<1x1x1024xi32, #tpu.memory_space<smem>>
      %c0_626 = arith.constant 0 : index
      %875 = arith.index_cast %874 : i32 to index
      %c0_627 = arith.constant 0 : index
      %876 = vector.load %arg4[%c0_626, %875, %c0_627] : memref<1x128x4xf32, #tpu.memory_space<vmem>>, vector<1x1x4xf32>
      %877 = vector.shape_cast %876 : vector<1x1x4xf32> to vector<1x4xf32>
      %878 = arith.subf %871, %877 : vector<1x4xf32>
      %879 = arith.maximumf %865, %878 : vector<1x4xf32>
      %c6_i32_628 = arith.constant 6 : i32
      %880 = arith.addi %798, %c6_i32_628 : i32
      %c0_629 = arith.constant 0 : index
      %c0_630 = arith.constant 0 : index
      %881 = arith.index_cast %880 : i32 to index
      %882 = memref.load %arg2[%c0_629, %c0_630, %881] : memref<1x1x1024xi32, #tpu.memory_space<smem>>
      %c0_631 = arith.constant 0 : index
      %883 = arith.index_cast %882 : i32 to index
      %c0_632 = arith.constant 0 : index
      %884 = vector.load %arg4[%c0_631, %883, %c0_632] : memref<1x128x4xf32, #tpu.memory_space<vmem>>, vector<1x1x4xf32>
      %885 = vector.shape_cast %884 : vector<1x1x4xf32> to vector<1x4xf32>
      %c6_i32_633 = arith.constant 6 : i32
      %886 = arith.addi %798, %c6_i32_633 : i32
      %c0_634 = arith.constant 0 : index
      %c0_635 = arith.constant 0 : index
      %887 = arith.index_cast %886 : i32 to index
      %888 = memref.load %arg3[%c0_634, %c0_635, %887] : memref<1x1x1024xi32, #tpu.memory_space<smem>>
      %c0_636 = arith.constant 0 : index
      %889 = arith.index_cast %888 : i32 to index
      %c0_637 = arith.constant 0 : index
      %890 = vector.load %arg4[%c0_636, %889, %c0_637] : memref<1x128x4xf32, #tpu.memory_space<vmem>>, vector<1x1x4xf32>
      %891 = vector.shape_cast %890 : vector<1x1x4xf32> to vector<1x4xf32>
      %892 = arith.subf %885, %891 : vector<1x4xf32>
      %893 = arith.maximumf %879, %892 : vector<1x4xf32>
      %c7_i32_638 = arith.constant 7 : i32
      %894 = arith.addi %798, %c7_i32_638 : i32
      %c0_639 = arith.constant 0 : index
      %c0_640 = arith.constant 0 : index
      %895 = arith.index_cast %894 : i32 to index
      %896 = memref.load %arg2[%c0_639, %c0_640, %895] : memref<1x1x1024xi32, #tpu.memory_space<smem>>
      %c0_641 = arith.constant 0 : index
      %897 = arith.index_cast %896 : i32 to index
      %c0_642 = arith.constant 0 : index
      %898 = vector.load %arg4[%c0_641, %897, %c0_642] : memref<1x128x4xf32, #tpu.memory_space<vmem>>, vector<1x1x4xf32>
      %899 = vector.shape_cast %898 : vector<1x1x4xf32> to vector<1x4xf32>
      %c7_i32_643 = arith.constant 7 : i32
      %900 = arith.addi %798, %c7_i32_643 : i32
      %c0_644 = arith.constant 0 : index
      %c0_645 = arith.constant 0 : index
      %901 = arith.index_cast %900 : i32 to index
      %902 = memref.load %arg3[%c0_644, %c0_645, %901] : memref<1x1x1024xi32, #tpu.memory_space<smem>>
      %c0_646 = arith.constant 0 : index
      %903 = arith.index_cast %902 : i32 to index
      %c0_647 = arith.constant 0 : index
      %904 = vector.load %arg4[%c0_646, %903, %c0_647] : memref<1x128x4xf32, #tpu.memory_space<vmem>>, vector<1x1x4xf32>
      %905 = vector.shape_cast %904 : vector<1x1x4xf32> to vector<1x4xf32>
      %906 = arith.subf %899, %905 : vector<1x4xf32>
      %907 = arith.maximumf %893, %906 : vector<1x4xf32>
      %908 = tpu.concatenate %130, %241, %352, %463, %574, %685, %796, %907 in 0 : vector<1x4xf32>, vector<1x4xf32>, vector<1x4xf32>, vector<1x4xf32>, vector<1x4xf32>, vector<1x4xf32>, vector<1x4xf32>, vector<1x4xf32> -> vector<8x4xf32>
      %909 = arith.index_cast %19 : i32 to index
      %c4 = arith.constant 4 : index
      %910 = vector.load %arg8[%909, %c4] : memref<128x8xf32, #tpu.memory_space<vmem>>, vector<8x4xf32>
      tpu.vector_store %arg8[%909, %c4], %908 {strides = array<i32>} : memref<128x8xf32, #tpu.memory_space<vmem>>, vector<8x4xf32>,
    }
    %c16_i32_3 = arith.constant 16 : i32
    %c0_4 = arith.constant 0 : index
    %c0_5 = arith.constant 0 : index
    %7 = vector.load %arg5[%c0_4, %c0_5] : memref<8x8xf32, #tpu.memory_space<vmem>>, vector<8x8xf32>
    %c0_6 = arith.constant 0 : index
    %c0_7 = arith.constant 0 : index
    %8 = vector.load %arg8[%c0_6, %c0_7] : memref<128x8xf32, #tpu.memory_space<vmem>>, vector<128x8xf32>
    "tpu.trace_start"() <{level = 10 : i32, message = "oc,nc->on"}> : () -> ()
    %cst = arith.constant dense<0.000000e+00> : vector<8x128xf32>
    %9 = tpu.matmul %7, %8, %cst {dimension_numbers = #tpu.dot_dimension_numbers<[1], [1], [0], [0], [0, 0, 1, 0], [], []>} : vector<8x8xf32>, vector<128x8xf32>, vector<8x128xf32> -> vector<8x128xf32>
    "tpu.trace_stop"() : () -> ()
    %c0_8 = arith.constant 0 : index
    %c0_9 = arith.constant 0 : index
    %10 = vector.load %arg6[%c0_8, %c0_9] : memref<8x1xf32, #tpu.memory_space<vmem>>, vector<8x1xf32>
    %11 = vector.broadcast %10 : vector<8x1xf32> to vector<8x128xf32>
    %12 = arith.addf %9, %11 : vector<8x128xf32>
    %cst_10 = arith.constant 0.000000e+00 : f32
    %13 = vector.broadcast %cst_10 : f32 to vector<8x128xf32>
    %14 = arith.maximumf %12, %13 : vector<8x128xf32>
    %c0_11 = arith.constant 0 : index
    %c0_12 = arith.constant 0 : index
    %c0_13 = arith.constant 0 : index
    %15 = vector.load %arg7[%c0_11, %c0_12, %c0_13] : memref<1x8x128xf32, #tpu.memory_space<vmem>>, vector<1x8x128xf32>
    %16 = vector.shape_cast %15 : vector<1x8x128xf32> to vector<8x128xf32>
    %17 = vector.shape_cast %14 : vector<8x128xf32> to vector<1x8x128xf32>
    tpu.vector_store %arg7[%c0_11, %c0_12, %c0_13], %17 {strides = array<i32>} : memref<1x8x128xf32, #tpu.memory_space<vmem>>, vector<1x8x128xf32>,
    return
  }
  func.func @transform_0(%arg0: i32, %arg1: i32) -> (i32, i32, i32) {
    %c0_i32 = arith.constant 0 : i32
    %c0_i32_0 = arith.constant 0 : i32
    return %arg0, %arg1, %c0_i32 : i32, i32, i32
  }
  func.func @transform_1(%arg0: i32, %arg1: i32) -> (i32, i32, i32) {
    %c0_i32 = arith.constant 0 : i32
    %c0_i32_0 = arith.constant 0 : i32
    return %arg0, %arg1, %c0_i32 : i32, i32, i32
  }
  func.func @transform_2(%arg0: i32, %arg1: i32) -> (i32, i32, i32) {
    %c0_i32 = arith.constant 0 : i32
    %c0_i32_0 = arith.constant 0 : i32
    %c0_i32_1 = arith.constant 0 : i32
    return %arg0, %c0_i32, %c0_i32_0 : i32, i32, i32
  }
  func.func @transform_3(%arg0: i32, %arg1: i32) -> (i32, i32) {
    %c0_i32 = arith.constant 0 : i32
    %c0_i32_0 = arith.constant 0 : i32
    %c0_i32_1 = arith.constant 0 : i32
    return %c0_i32, %c0_i32_0 : i32, i32
  }
  func.func @transform_4(%arg0: i32, %arg1: i32) -> (i32, i32) {
    %c0_i32 = arith.constant 0 : i32
    %c0_i32_0 = arith.constant 0 : i32
    %c0_i32_1 = arith.constant 0 : i32
    return %c0_i32, %c0_i32_0 : i32, i32
  }
  func.func @transform_5(%arg0: i32, %arg1: i32) -> (i32, i32, i32) {
    %c0_i32 = arith.constant 0 : i32
    %c0_i32_0 = arith.constant 0 : i32
    return %arg0, %c0_i32, %arg1 : i32, i32, i32
  }
}

</mosaic_0001>

<llo_original>
// kernel: tpu_custom_call.1
$region0: #{tpu_custom_call.1}
  #allocation0 [shape = 'u32[]', space=smem, size = 0x4, offset = 0x4, fixed_abs, tag = 'smem constant byte address 0x4 - core index']
  #allocation1 [shape = 'u32[144,128]{1,0:T(1,128)}', space=vmem, size = 0x12000, scoped, tag = 'internal scratch']
  #allocation2 [shape = 'f32[128,8]{1,0:T(8,128)}', space=vmem, size = 0x10000, scoped, tag = 'scratch operand']
  %s0 = inlined_call_operand.vmem [shape: s32[2,1,1024], index: 0, kind: input, shape index: {}]
  %s1 = inlined_call_operand.vmem [shape: s32[2,1,1024], index: 1, kind: input, shape index: {}]
  %s2 = inlined_call_operand.vmem [shape: f32[2,128,4], index: 2, kind: input, shape index: {}]
  %s3 = inlined_call_operand.vmem [shape: f32[8,8], index: 3, kind: input, shape index: {}]
  %s4 = inlined_call_operand.vmem [shape: f32[8,1], index: 4, kind: input, shape index: {}]
  %s5 = inlined_call_operand.hbm [shape: f32[2,8,128], index: 5, kind: output, shape index: {}]
  %s6 = sld [smem:[#allocation0]]
  $region68: #{tpu_custom_call.1} parent=0
    _
  %s8 = ssub.s32 1, %s6
  %s9 = scalar_select 0, %s8, %s6
  $region1: #{tpu_custom_call.1} parent=0
    #allocation3 [shape = 'u8[8192]{0}', space=smem, size = 0x2000, scoped, tag = 'input window, operand 0']
    #allocation4 [shape = 's32[2]{0}', space=sflag, size = 0x8, scoped, tag = 'scoped memory for tpu_custom_call.1']
    #allocation5 [shape = 's32[2]{0}', space=sflag, size = 0x8, scoped, tag = 'scoped memory for tpu_custom_call.1']
    #allocation6 [shape = 'u8[8192]{0}', space=smem, size = 0x2000, scoped, tag = 'input window, operand 1']
    #allocation7 [shape = 's32[2]{0}', space=sflag, size = 0x8, scoped, tag = 'scoped memory for tpu_custom_call.1']
    #allocation8 [shape = 'u8[8192]{0}', space=vmem, size = 0x2000, scoped, tag = 'output window, operand 0']
    %10 = vsyncpa [#allocation5], 0
    %s11 = scalar_lea.sflag [#allocation5], 1
    %12 = vsyncpa %s11, 0
    %13 = vsyncpa [#allocation7], 0
    %s14 = scalar_lea.sflag [#allocation7], 1
    %15 = vsyncpa %s14, 0
    %16 = vsyncpa [#allocation4], 0
    %s17 = scalar_lea.sflag [#allocation4], 1
    %18 = vsyncpa %s17, 0
    loop: start=0, step=1, limit=4
    $region2: #{tpu_custom_call.1} parent=1 // loop_pre_header
      _
    $region3: #{tpu_custom_call.1} parent=1 // loop_header
      %s20 = sphi 0, %s24
      %p21 = scmp.ge.s32.totalorder %s20, 4
      %s27 = sphi 0, %s39
      %s28 = sphi 0, %s35
      %s29 = sphi 0, %s27
      %s30 = sphi 0, %s28
      %s31 = sphi 0, %s29
      %s32 = sphi 0, %s30
      %s44 = sphi 0, %s46
      %s47 = sphi 0, %s44
      %s48 = sphi 0, %s47
      %s64 = sphi 0, %s48
      %s72 = sphi 0, %s74
      %s75 = sphi 0, %s72
      %s76 = sphi 0, %s75
      %s92 = sphi 0, %s76
      %s98 = sphi 0, %s100
      %s101 = sphi 0, %s98
      %s102 = sphi 0, %s101
      %s118 = sphi 0, %s102
      %s122 = sphi 0, %s122
      %s124 = sphi 0, %s122
      %s125 = sphi 0, %s124
      %s139 = sphi 0, %s125
      %s143 = sphi 0, %s143
      %s145 = sphi 0, %s143
      %s146 = sphi 0, %s145
      %s160 = sphi 0, %s146
      %s168 = sphi 0, %s170
      %s171 = sphi 0, %s168
      %s172 = sphi 0, %s171
      %s188 = sphi 0, %s172
    $region4: #{tpu_custom_call.1} parent=1 // loop_header_branch
      %23 = sbr.rel (%p21) target = $region8
    $region5: #{tpu_custom_call.1} parent=1 // loop_body
      %s25 = ssub.s32 %s20, 1
      %s26 = ssub.s32 %s20, 2
      %s33 = sadd.s32 1, %s28
      %p34 = scmp.ge.s32.totalorder %s33, 1
      %s35 = scalar_select %p34, 0, %s33
      %s36 = sadd.s32 1, %s27
      %s37 = scalar_select %p34, %s36, %s27
      %p38 = scmp.ge.s32.totalorder %s37, 2
      %s39 = scalar_select %p38, 0, %s37
      %s40 = ssub.s32 %s27, %s39
      %s41 = ssub.s32 %s28, %s35
      %s42 = sor.u32 %s40, %s41
      %p43 = scmp.eq.s32.totalorder %s42, 0
      %s45 = sadd.s32 %s44, 1
      %s46 = scalar_select %p43, %s44, %s45
      %p49 = pneg %p43
      %p50 = scmp.eq.s32.totalorder %s20, 1
      %p51 = por %p49, %p50
      %p52 = scmp.ne.s32.totalorder %s44, %s47
      %p53 = scmp.eq.s32.totalorder %s20, 0
      %p54 = por %p52, %p53
      %p55 = scmp.ne.s32.totalorder %s44, %s47
      %p56 = scmp.eq.s32.totalorder %s25, 1
      %p57 = por %p55, %p56
      %p58 = scmp.ne.s32.totalorder %s47, %s48
      %p59 = scmp.eq.s32.totalorder %s25, 0
      %p60 = por %p58, %p59
      %p61 = scmp.ne.s32.totalorder %s47, %s48
      %p62 = scmp.eq.s32.totalorder %s26, 1
      %p63 = por %p61, %p62
      %p65 = scmp.ne.s32.totalorder %s48, %s64
      %p66 = scmp.eq.s32.totalorder %s26, 0
      %p67 = por %p65, %p66
      %s68 = ssub.s32 %s27, %s39
      %s69 = ssub.s32 %s28, %s35
      %s70 = sor.u32 %s68, %s69
      %p71 = scmp.eq.s32.totalorder %s70, 0
      %s73 = sadd.s32 %s72, 1
      %s74 = scalar_select %p71, %s72, %s73
      %p77 = pneg %p71
      %p78 = scmp.eq.s32.totalorder %s20, 1
      %p79 = por %p77, %p78
      %p80 = scmp.ne.s32.totalorder %s72, %s75
      %p81 = scmp.eq.s32.totalorder %s20, 0
      %p82 = por %p80, %p81
      %p83 = scmp.ne.s32.totalorder %s72, %s75
      %p84 = scmp.eq.s32.totalorder %s25, 1
      %p85 = por %p83, %p84
      %p86 = scmp.ne.s32.totalorder %s75, %s76
      %p87 = scmp.eq.s32.totalorder %s25, 0
      %p88 = por %p86, %p87
      %p89 = scmp.ne.s32.totalorder %s75, %s76
      %p90 = scmp.eq.s32.totalorder %s26, 1
      %p91 = por %p89, %p90
      %p93 = scmp.ne.s32.totalorder %s76, %s92
      %p94 = scmp.eq.s32.totalorder %s26, 0
      %p95 = por %p93, %p94
      %s96 = ssub.s32 %s27, %s39
      %p97 = scmp.eq.s32.totalorder %s96, 0
      %s99 = sadd.s32 %s98, 1
      %s100 = scalar_select %p97, %s98, %s99
      %p103 = pneg %p97
      %p104 = scmp.eq.s32.totalorder %s20, 1
      %p105 = por %p103, %p104
      %p106 = scmp.ne.s32.totalorder %s98, %s101
      %p107 = scmp.eq.s32.totalorder %s20, 0
      %p108 = por %p106, %p107
      %p109 = scmp.ne.s32.totalorder %s98, %s101
      %p110 = scmp.eq.s32.totalorder %s25, 1
      %p111 = por %p109, %p110
      %p112 = scmp.ne.s32.totalorder %s101, %s102
      %p113 = scmp.eq.s32.totalorder %s25, 0
      %p114 = por %p112, %p113
      %p115 = scmp.ne.s32.totalorder %s101, %s102
      %p116 = scmp.eq.s32.totalorder %s26, 1
      %p117 = por %p115, %p116
      %p119 = scmp.ne.s32.totalorder %s102, %s118
      %p120 = scmp.eq.s32.totalorder %s26, 0
      %p121 = por %p119, %p120
      %s123 = sadd.s32 %s122, 1
      %p126 = scmp.eq.s32.totalorder %s20, 1
      %p127 = scmp.ne.s32.totalorder %s122, %s124
      %p128 = scmp.eq.s32.totalorder %s20, 0
      %p129 = por %p127, %p128
      %p130 = scmp.ne.s32.totalorder %s122, %s124
      %p131 = scmp.eq.s32.totalorder %s25, 1
      %p132 = por %p130, %p131
      %p133 = scmp.ne.s32.totalorder %s124, %s125
      %p134 = scmp.eq.s32.totalorder %s25, 0
      %p135 = por %p133, %p134
      %p136 = scmp.ne.s32.totalorder %s124, %s125
      %p137 = scmp.eq.s32.totalorder %s26, 1
      %p138 = por %p136, %p137
      %p140 = scmp.ne.s32.totalorder %s125, %s139
      %p141 = scmp.eq.s32.totalorder %s26, 0
      %p142 = por %p140, %p141
      %s144 = sadd.s32 %s143, 1
      %p147 = scmp.eq.s32.totalorder %s20, 1
      %p148 = scmp.ne.s32.totalorder %s143, %s145
      %p149 = scmp.eq.s32.totalorder %s20, 0
      %p150 = por %p148, %p149
      %p151 = scmp.ne.s32.totalorder %s143, %s145
      %p152 = scmp.eq.s32.totalorder %s25, 1
      %p153 = por %p151, %p152
      %p154 = scmp.ne.s32.totalorder %s145, %s146
      %p155 = scmp.eq.s32.totalorder %s25, 0
      %p156 = por %p154, %p155
      %p157 = scmp.ne.s32.totalorder %s145, %s146
      %p158 = scmp.eq.s32.totalorder %s26, 1
      %p159 = por %p157, %p158
      %p161 = scmp.ne.s32.totalorder %s146, %s160
      %p162 = scmp.eq.s32.totalorder %s26, 0
      %p163 = por %p161, %p162
      %s164 = ssub.s32 %s27, %s39
      %s165 = ssub.s32 %s28, %s35
      %s166 = sor.u32 %s164, %s165
      %p167 = scmp.eq.s32.totalorder %s166, 0
      %s169 = sadd.s32 %s168, 1
      %s170 = scalar_select %p167, %s168, %s169
      %p173 = pneg %p167
      %p174 = scmp.eq.s32.totalorder %s20, 1
      %p175 = por %p173, %p174
      %p176 = scmp.ne.s32.totalorder %s168, %s171
      %p177 = scmp.eq.s32.totalorder %s20, 0
      %p178 = por %p176, %p177
      %p179 = scmp.ne.s32.totalorder %s168, %s171
      %p180 = scmp.eq.s32.totalorder %s25, 1
      %p181 = por %p179, %p180
      %p182 = scmp.ne.s32.totalorder %s171, %s172
      %p183 = scmp.eq.s32.totalorder %s25, 0
      %p184 = por %p182, %p183
      %p185 = scmp.ne.s32.totalorder %s171, %s172
      %p186 = scmp.eq.s32.totalorder %s26, 1
      %p187 = por %p185, %p186
      %p189 = scmp.ne.s32.totalorder %s172, %s188
      %p190 = scmp.eq.s32.totalorder %s26, 0
      %p191 = por %p189, %p190
      %p192 = scmp.le.s32.totalorder 1, %s20
      %p193 = scmp.lt.s32.totalorder %s20, 3
      %p194 = pnand %p192, %p193
      %p195 = pneg %p194
      // Predicated region
      $region9: #{tpu_custom_call.1} parent=5 // pred_check
        _
      $region10: #{tpu_custom_call.1} parent=5 // pred_check_branch
        %197 = sbr.rel (%p194) target = $region12
      $region11: #{tpu_custom_call.1} parent=5 // pred_region
        %s198 = ssub.s32 %s20, 1
        // Predicated region
        $region13: #{tpu_custom_call.1} parent=11 // pred_check
          %p199 = pneg %p135
        $region14: #{tpu_custom_call.1} parent=11 // pred_check_branch
          %201 = sbr.rel (%p199) target = $region16
        $region15: #{tpu_custom_call.1} parent=11 // pred_region
          _
        $region16: #{tpu_custom_call.1} parent=11 // pred_fallthru
          _
        // Predicated region
        $region17: #{tpu_custom_call.1} parent=11 // pred_check
          %p202 = pneg %p156
        $region18: #{tpu_custom_call.1} parent=11 // pred_check_branch
          %204 = sbr.rel (%p202) target = $region20
        $region19: #{tpu_custom_call.1} parent=11 // pred_region
          _
        $region20: #{tpu_custom_call.1} parent=11 // pred_fallthru
          _
      $region12: #{tpu_custom_call.1} parent=5 // pred_fallthru
        _
      %p205 = scmp.lt.s32.totalorder %s20, 2
      // Predicated region
      $region21: #{tpu_custom_call.1} parent=5 // pred_check
        %p206 = pneg %p205
      $region22: #{tpu_custom_call.1} parent=5 // pred_check_branch
        %208 = sbr.rel (%p206) target = $region24
      $region23: #{tpu_custom_call.1} parent=5 // pred_region
        // Predicated region
        $region25: #{tpu_custom_call.1} parent=23 // pred_check
          %p209 = pneg %p54
        $region26: #{tpu_custom_call.1} parent=23 // pred_check_branch
          %211 = sbr.rel (%p209) target = $region28
        $region27: #{tpu_custom_call.1} parent=23 // pred_region
          %s212 = sand.u32 %s44, 1
          %s213 = scalar_lea.sflag [#allocation5], %s212
          %s214 = sand.u32 %s44, 1
          %s215 = smul.addr %s214, 1024
          %s216 = scalar_lea.smem [#allocation3], %s215
          %s218 = ssub.s32 128, 128
          %219 = vsyncadd %s213, %s218
          %s220 = smul.addr %s28, 8
          %s221 = smul.addr %s27, 8
          %s222 = sadd.s32 %s220, %s221
          %s223 = scalar_lea.vmem %s0, %s222
          %s225 = sshll.u32 %s223, 4
          %s226 = int_to_ptr.vmem [resolvable:$true] %s225
          %228 = dma.vmem_to_smem %s226, 128, %s216, %s213
        $region28: #{tpu_custom_call.1} parent=23 // pred_fallthru
          _
        // Predicated region
        $region29: #{tpu_custom_call.1} parent=23 // pred_check
          %p229 = pneg %p82
        $region30: #{tpu_custom_call.1} parent=23 // pred_check_branch
          %231 = sbr.rel (%p229) target = $region32
        $region31: #{tpu_custom_call.1} parent=23 // pred_region
          %s232 = sand.u32 %s72, 1
          %s233 = scalar_lea.sflag [#allocation7], %s232
          %s234 = sand.u32 %s72, 1
          %s235 = smul.addr %s234, 1024
          %s236 = scalar_lea.smem [#allocation6], %s235
          %s238 = ssub.s32 128, 128
          %239 = vsyncadd %s233, %s238
          %s240 = smul.addr %s28, 8
          %s241 = smul.addr %s27, 8
          %s242 = sadd.s32 %s240, %s241
          %s243 = scalar_lea.vmem %s1, %s242
          %s245 = sshll.u32 %s243, 4
          %s246 = int_to_ptr.vmem [resolvable:$true] %s245
          %248 = dma.vmem_to_smem %s246, 128, %s236, %s233
        $region32: #{tpu_custom_call.1} parent=23 // pred_fallthru
          _
        // Predicated region
        $region33: #{tpu_custom_call.1} parent=23 // pred_check
          %p249 = pneg %p108
        $region34: #{tpu_custom_call.1} parent=23 // pred_check_branch
          %251 = sbr.rel (%p249) target = $region36
        $region35: #{tpu_custom_call.1} parent=23 // pred_region
          %p252 = scmp.lt.s32.totalorder %s27, 1
          %s253 = scalar_select %p252, %s27, 1
          %s254 = smul.addr %s253, 16
          %s255 = smul.addr %s254, 8
          %s256 = scalar_lea.vmem %s2, %s255
        $region36: #{tpu_custom_call.1} parent=23 // pred_fallthru
          _
      $region24: #{tpu_custom_call.1} parent=5 // pred_fallthru
        _
      %p257 = scmp.le.s32.totalorder 1, %s20
      %p258 = scmp.lt.s32.totalorder %s20, 3
      %p259 = pnand %p257, %p258
      %p260 = pneg %p259
      // Predicated region
      $region37: #{tpu_custom_call.1} parent=5 // pred_check
        _
      $region38: #{tpu_custom_call.1} parent=5 // pred_check_branch
        %262 = sbr.rel (%p259) target = $region40
      $region39: #{tpu_custom_call.1} parent=5 // pred_region
        %s263 = ssub.s32 %s20, 1
        %s264 = sand.u32 %s47, 1
        %s265 = scalar_lea.sflag [#allocation5], %s264
        %s266 = sand.u32 %s47, 1
        %s267 = smul.addr %s266, 1024
        %s268 = scalar_lea.smem [#allocation3], %s267
        // Predicated region
        $region41: #{tpu_custom_call.1} parent=39 // pred_check
          %p269 = pneg %p60
        $region42: #{tpu_custom_call.1} parent=39 // pred_check_branch
          %271 = sbr.rel (%p269) target = $region44
        $region43: #{tpu_custom_call.1} parent=39 // pred_region
          %272 = dma.done %s265, 128
        $region44: #{tpu_custom_call.1} parent=39 // pred_fallthru
          _
        %s273 = sand.u32 %s75, 1
        %s274 = scalar_lea.sflag [#allocation7], %s273
        %s275 = sand.u32 %s75, 1
        %s276 = smul.addr %s275, 1024
        %s277 = scalar_lea.smem [#allocation6], %s276
        // Predicated region
        $region45: #{tpu_custom_call.1} parent=39 // pred_check
          %p278 = pneg %p88
        $region46: #{tpu_custom_call.1} parent=39 // pred_check_branch
          %280 = sbr.rel (%p278) target = $region48
        $region47: #{tpu_custom_call.1} parent=39 // pred_region
          %281 = dma.done %s274, 128
        $region48: #{tpu_custom_call.1} parent=39 // pred_fallthru
          _
        %282 = sfence
        %s283 = sand.u32 %s47, 1
        %s284 = scalar_lea.sflag [#allocation5], %s283
        %s285 = sand.u32 %s47, 1
        %s286 = smul.addr %s285, 1024
        %s287 = scalar_lea.smem [#allocation3], %s286
        %p288 = pneg %p60
        %p289 = pneg %p57
        %s290 = sand.u32 %s75, 1
        %s291 = scalar_lea.sflag [#allocation7], %s290
        %s292 = sand.u32 %s75, 1
        %s293 = smul.addr %s292, 1024
        %s294 = scalar_lea.smem [#allocation6], %s293
        %p295 = pneg %p88
        %p296 = pneg %p85
        %p297 = scmp.lt.s32.totalorder %s29, 1
        %s298 = scalar_select %p297, %s29, 1
        %s299 = smul.addr %s298, 16
        %s300 = smul.addr %s299, 8
        %s301 = scalar_lea.vmem %s2, %s300
        %p302 = pneg %p114
        %p303 = pneg %p111
        %p304 = pneg %p135
        %p305 = pneg %p132
        %p306 = pneg %p156
        %p307 = pneg %p153
        %p308 = pneg %p184
        %p309 = pneg %p181
        %s310 = sand.u32 %s171, 1
        %s311 = scalar_lea.sflag [#allocation4], %s310
        %s312 = sand.u32 %s171, 1
        %s313 = smul.addr %s312, 8
        %s314 = scalar_lea.vmem [#allocation8], %s313
        %p315 = scmp.lt.s32.totalorder %s29, 1
        %s316 = scalar_select %p315, %s29, 1
        %s317 = smul.addr %s316, 16
        %s318 = smul.addr %s317, 8
        %s319 = scalar_lea.vmem %s2, %s318
        %s320 = smul.u32 %s30, 128
        %s321 = scalar_lea.vmem %s319, %s320
        %v322 = vld [vmem:[%s321] sm:$0xff]
        %v323 = vld [vmem:[%s321 + $0x8] sm:$0xff]
        %v324 = vld [vmem:[%s321 + $0x10] sm:$0xff]
        %v325 = vld [vmem:[%s321 + $0x18] sm:$0xff]
        %v326 = vld [vmem:[%s321 + $0x20] sm:$0xff]
        %v327 = vld [vmem:[%s321 + $0x28] sm:$0xff]
        %v328 = vld [vmem:[%s321 + $0x30] sm:$0xff]
        %v329 = vld [vmem:[%s321 + $0x38] sm:$0xff]
        %v330 = vld [vmem:[%s321 + $0x40] sm:$0xff]
        %v331 = vld [vmem:[%s321 + $0x48] sm:$0xff]
        %v332 = vld [vmem:[%s321 + $0x50] sm:$0xff]
        %v333 = vld [vmem:[%s321 + $0x58] sm:$0xff]
        %v334 = vld [vmem:[%s321 + $0x60] sm:$0xff]
        %v335 = vld [vmem:[%s321 + $0x68] sm:$0xff]
        %v336 = vld [vmem:[%s321 + $0x70] sm:$0xff]
        %v337 = vld [vmem:[%s321 + $0x78] sm:$0xff]
        %vm338 = vcmask 31744
        %339 = vst.msk [vmem:[#allocation2] sm:$0xff] %vm338, %v322
        %340 = vst.msk [vmem:[#allocation2 + $0x8] sm:$0xff] %vm338, %v323
        %341 = vst.msk [vmem:[#allocation2 + $0x10] sm:$0xff] %vm338, %v324
        %342 = vst.msk [vmem:[#allocation2 + $0x18] sm:$0xff] %vm338, %v325
        %343 = vst.msk [vmem:[#allocation2 + $0x20] sm:$0xff] %vm338, %v326
        %344 = vst.msk [vmem:[#allocation2 + $0x28] sm:$0xff] %vm338, %v327
        %345 = vst.msk [vmem:[#allocation2 + $0x30] sm:$0xff] %vm338, %v328
        %346 = vst.msk [vmem:[#allocation2 + $0x38] sm:$0xff] %vm338, %v329
        %347 = vst.msk [vmem:[#allocation2 + $0x40] sm:$0xff] %vm338, %v330
        %348 = vst.msk [vmem:[#allocation2 + $0x48] sm:$0xff] %vm338, %v331
        %349 = vst.msk [vmem:[#allocation2 + $0x50] sm:$0xff] %vm338, %v332
        %350 = vst.msk [vmem:[#allocation2 + $0x58] sm:$0xff] %vm338, %v333
        %351 = vst.msk [vmem:[#allocation2 + $0x60] sm:$0xff] %vm338, %v334
        %352 = vst.msk [vmem:[#allocation2 + $0x68] sm:$0xff] %vm338, %v335
        %353 = vst.msk [vmem:[#allocation2 + $0x70] sm:$0xff] %vm338, %v336
        %354 = vst.msk [vmem:[#allocation2 + $0x78] sm:$0xff] %vm338, %v337
        loop: start=0, step=1, limit=16
        $region49: #{tpu_custom_call.1} parent=39 // loop_pre_header
          _
        $region50: #{tpu_custom_call.1} parent=39 // loop_header
          %s356 = sphi 0, %s360
          %p357 = scmp.ge.s32.totalorder %s356, 16
        $region51: #{tpu_custom_call.1} parent=39 // loop_header_branch
          %359 = sbr.rel (%p357) target = $region55
        $region52: #{tpu_custom_call.1} parent=39 // loop_body
          %s361 = smul.u32 %s356, 8
          %s362 = smul.u32 %s361, 8
          %s363 = sld [smem:[%s268 + %s362]]
          %s364 = scalar_lea.vmem %s319, %s363
          %v365 = vld [vmem:[%s364] sm:$0x1]
          %s366 = sld [smem:[%s277 + %s362]]
          %s367 = scalar_lea.vmem %s319, %s366
          %v368 = vld [vmem:[%s367] sm:$0x1]
          %v369 = vsub.f32 %v365, %v368
          %s370 = sadd.s32 %s362, 1
          %s371 = sld [smem:[%s268 + %s370]]
          %s372 = scalar_lea.vmem %s319, %s371
          %v373 = vld [vmem:[%s372] sm:$0x1]
          %s374 = sld [smem:[%s277 + %s370]]
          %s375 = scalar_lea.vmem %s319, %s374
          %v376 = vld [vmem:[%s375] sm:$0x1]
          %v377 = vsub.f32 %v373, %v376
          %v378 = vmax.f32 %v369, %v377
          %s379 = sadd.s32 %s362, 2
          %s380 = sld [smem:[%s268 + %s379]]
          %s381 = scalar_lea.vmem %s319, %s380
          %v382 = vld [vmem:[%s381] sm:$0x1]
          %s383 = sld [smem:[%s277 + %s379]]
          %s384 = scalar_lea.vmem %s319, %s383
          %v385 = vld [vmem:[%s384] sm:$0x1]
          %v386 = vsub.f32 %v382, %v385
          %v387 = vmax.f32 %v378, %v386
          %s388 = sadd.s32 %s362, 3
          %s389 = sld [smem:[%s268 + %s388]]
          %s390 = scalar_lea.vmem %s319, %s389
          %v391 = vld [vmem:[%s390] sm:$0x1]
          %s392 = sld [smem:[%s277 + %s388]]
          %s393 = scalar_lea.vmem %s319, %s392
          %v394 = vld [vmem:[%s393] sm:$0x1]
          %v395 = vsub.f32 %v391, %v394
          %v396 = vmax.f32 %v387, %v395
          %s397 = sadd.s32 %s362, 4
          %s398 = sld [smem:[%s268 + %s397]]
          %s399 = scalar_lea.vmem %s319, %s398
          %v400 = vld [vmem:[%s399] sm:$0x1]
          %s401 = sld [smem:[%s277 + %s397]]
          %s402 = scalar_lea.vmem %s319, %s401
          %v403 = vld [vmem:[%s402] sm:$0x1]
          %v404 = vsub.f32 %v400, %v403
          %v405 = vmax.f32 %v396, %v404
          %s406 = sadd.s32 %s362, 5
          %s407 = sld [smem:[%s268 + %s406]]
          %s408 = scalar_lea.vmem %s319, %s407
          %v409 = vld [vmem:[%s408] sm:$0x1]
          %s410 = sld [smem:[%s277 + %s406]]
          %s411 = scalar_lea.vmem %s319, %s410
          %v412 = vld [vmem:[%s411] sm:$0x1]
          %v413 = vsub.f32 %v409, %v412
          %v414 = vmax.f32 %v405, %v413
          %s415 = sadd.s32 %s362, 6
          %s416 = sld [smem:[%s268 + %s415]]
          %s417 = scalar_lea.vmem %s319, %s416
          %v418 = vld [vmem:[%s417] sm:$0x1]
          %s419 = sld [smem:[%s277 + %s415]]
          %s420 = scalar_lea.vmem %s319, %s419
          %v421 = vld [vmem:[%s420] sm:$0x1]
          %v422 = vsub.f32 %v418, %v421
          %v423 = vmax.f32 %v414, %v422
          %s424 = sadd.s32 %s362, 7
          %s425 = sld [smem:[%s268 + %s424]]
          %s426 = scalar_lea.vmem %s319, %s425
          %v427 = vld [vmem:[%s426] sm:$0x1]
          %s428 = sld [smem:[%s277 + %s424]]
          %s429 = scalar_lea.vmem %s319, %s428
          %v430 = vld [vmem:[%s429] sm:$0x1]
          %v431 = vsub.f32 %v427, %v430
          %v432 = vmax.f32 %v423, %v431
          %s433 = sadd.s32 %s361, 1
          %s434 = smul.u32 %s433, 8
          %s435 = sld [smem:[%s268 + %s434]]
          %s436 = scalar_lea.vmem %s319, %s435
          %v437 = vld [vmem:[%s436] sm:$0x1]
          %s438 = sld [smem:[%s277 + %s434]]
          %s439 = scalar_lea.vmem %s319, %s438
          %v440 = vld [vmem:[%s439] sm:$0x1]
          %v441 = vsub.f32 %v437, %v440
          %s442 = sadd.s32 %s434, 1
          %s443 = sld [smem:[%s268 + %s442]]
          %s444 = scalar_lea.vmem %s319, %s443
          %v445 = vld [vmem:[%s444] sm:$0x1]
          %s446 = sld [smem:[%s277 + %s442]]
          %s447 = scalar_lea.vmem %s319, %s446
          %v448 = vld [vmem:[%s447] sm:$0x1]
          %v449 = vsub.f32 %v445, %v448
          %v450 = vmax.f32 %v441, %v449
          %s451 = sadd.s32 %s434, 2
          %s452 = sld [smem:[%s268 + %s451]]
          %s453 = scalar_lea.vmem %s319, %s452
          %v454 = vld [vmem:[%s453] sm:$0x1]
          %s455 = sld [smem:[%s277 + %s451]]
          %s456 = scalar_lea.vmem %s319, %s455
          %v457 = vld [vmem:[%s456] sm:$0x1]
          %v458 = vsub.f32 %v454, %v457
          %v459 = vmax.f32 %v450, %v458
          %s460 = sadd.s32 %s434, 3
          %s461 = sld [smem:[%s268 + %s460]]
          %s462 = scalar_lea.vmem %s319, %s461
          %v463 = vld [vmem:[%s462] sm:$0x1]
          %s464 = sld [smem:[%s277 + %s460]]
          %s465 = scalar_lea.vmem %s319, %s464
          %v466 = vld [vmem:[%s465] sm:$0x1]
          %v467 = vsub.f32 %v463, %v466
          %v468 = vmax.f32 %v459, %v467
          %s469 = sadd.s32 %s434, 4
          %s470 = sld [smem:[%s268 + %s469]]
          %s471 = scalar_lea.vmem %s319, %s470
          %v472 = vld [vmem:[%s471] sm:$0x1]
          %s473 = sld [smem:[%s277 + %s469]]
          %s474 = scalar_lea.vmem %s319, %s473
          %v475 = vld [vmem:[%s474] sm:$0x1]
          %v476 = vsub.f32 %v472, %v475
          %v477 = vmax.f32 %v468, %v476
          %s478 = sadd.s32 %s434, 5
          %s479 = sld [smem:[%s268 + %s478]]
          %s480 = scalar_lea.vmem %s319, %s479
          %v481 = vld [vmem:[%s480] sm:$0x1]
          %s482 = sld [smem:[%s277 + %s478]]
          %s483 = scalar_lea.vmem %s319, %s482
          %v484 = vld [vmem:[%s483] sm:$0x1]
          %v485 = vsub.f32 %v481, %v484
          %v486 = vmax.f32 %v477, %v485
          %s487 = sadd.s32 %s434, 6
          %s488 = sld [smem:[%s268 + %s487]]
          %s489 = scalar_lea.vmem %s319, %s488
          %v490 = vld [vmem:[%s489] sm:$0x1]
          %s491 = sld [smem:[%s277 + %s487]]
          %s492 = scalar_lea.vmem %s319, %s491
          %v493 = vld [vmem:[%s492] sm:$0x1]
          %v494 = vsub.f32 %v490, %v493
          %v495 = vmax.f32 %v486, %v494
          %s496 = sadd.s32 %s434, 7
          %s497 = sld [smem:[%s268 + %s496]]
          %s498 = scalar_lea.vmem %s319, %s497
          %v499 = vld [vmem:[%s498] sm:$0x1]
          %s500 = sld [smem:[%s277 + %s496]]
          %s501 = scalar_lea.vmem %s319, %s500
          %v502 = vld [vmem:[%s501] sm:$0x1]
          %v503 = vsub.f32 %v499, %v502
          %v504 = vmax.f32 %v495, %v503
          %s505 = sadd.s32 %s361, 2
          %s506 = smul.u32 %s505, 8
          %s507 = sld [smem:[%s268 + %s506]]
          %s508 = scalar_lea.vmem %s319, %s507
          %v509 = vld [vmem:[%s508] sm:$0x1]
          %s510 = sld [smem:[%s277 + %s506]]
          %s511 = scalar_lea.vmem %s319, %s510
          %v512 = vld [vmem:[%s511] sm:$0x1]
          %v513 = vsub.f32 %v509, %v512
          %s514 = sadd.s32 %s506, 1
          %s515 = sld [smem:[%s268 + %s514]]
          %s516 = scalar_lea.vmem %s319, %s515
          %v517 = vld [vmem:[%s516] sm:$0x1]
          %s518 = sld [smem:[%s277 + %s514]]
          %s519 = scalar_lea.vmem %s319, %s518
          %v520 = vld [vmem:[%s519] sm:$0x1]
          %v521 = vsub.f32 %v517, %v520
          %v522 = vmax.f32 %v513, %v521
          %s523 = sadd.s32 %s506, 2
          %s524 = sld [smem:[%s268 + %s523]]
          %s525 = scalar_lea.vmem %s319, %s524
          %v526 = vld [vmem:[%s525] sm:$0x1]
          %s527 = sld [smem:[%s277 + %s523]]
          %s528 = scalar_lea.vmem %s319, %s527
          %v529 = vld [vmem:[%s528] sm:$0x1]
          %v530 = vsub.f32 %v526, %v529
          %v531 = vmax.f32 %v522, %v530
          %s532 = sadd.s32 %s506, 3
          %s533 = sld [smem:[%s268 + %s532]]
          %s534 = scalar_lea.vmem %s319, %s533
          %v535 = vld [vmem:[%s534] sm:$0x1]
          %s536 = sld [smem:[%s277 + %s532]]
          %s537 = scalar_lea.vmem %s319, %s536
          %v538 = vld [vmem:[%s537] sm:$0x1]
          %v539 = vsub.f32 %v535, %v538
          %v540 = vmax.f32 %v531, %v539
          %s541 = sadd.s32 %s506, 4
          %s542 = sld [smem:[%s268 + %s541]]
          %s543 = scalar_lea.vmem %s319, %s542
          %v544 = vld [vmem:[%s543] sm:$0x1]
          %s545 = sld [smem:[%s277 + %s541]]
          %s546 = scalar_lea.vmem %s319, %s545
          %v547 = vld [vmem:[%s546] sm:$0x1]
          %v548 = vsub.f32 %v544, %v547
          %v549 = vmax.f32 %v540, %v548
          %s550 = sadd.s32 %s506, 5
          %s551 = sld [smem:[%s268 + %s550]]
          %s552 = scalar_lea.vmem %s319, %s551
          %v553 = vld [vmem:[%s552] sm:$0x1]
          %s554 = sld [smem:[%s277 + %s550]]
          %s555 = scalar_lea.vmem %s319, %s554
          %v556 = vld [vmem:[%s555] sm:$0x1]
          %v557 = vsub.f32 %v553, %v556
          %v558 = vmax.f32 %v549, %v557
          %s559 = sadd.s32 %s506, 6
          %s560 = sld [smem:[%s268 + %s559]]
          %s561 = scalar_lea.vmem %s319, %s560
          %v562 = vld [vmem:[%s561] sm:$0x1]
          %s563 = sld [smem:[%s277 + %s559]]
          %s564 = scalar_lea.vmem %s319, %s563
          %v565 = vld [vmem:[%s564] sm:$0x1]
          %v566 = vsub.f32 %v562, %v565
          %v567 = vmax.f32 %v558, %v566
          %s568 = sadd.s32 %s506, 7
          %s569 = sld [smem:[%s268 + %s568]]
          %s570 = scalar_lea.vmem %s319, %s569
          %v571 = vld [vmem:[%s570] sm:$0x1]
          %s572 = sld [smem:[%s277 + %s568]]
          %s573 = scalar_lea.vmem %s319, %s572
          %v574 = vld [vmem:[%s573] sm:$0x1]
          %v575 = vsub.f32 %v571, %v574
          %v576 = vmax.f32 %v567, %v575
          %s577 = sadd.s32 %s361, 3
          %s578 = smul.u32 %s577, 8
          %s579 = sld [smem:[%s268 + %s578]]
          %s580 = scalar_lea.vmem %s319, %s579
          %v581 = vld [vmem:[%s580] sm:$0x1]
          %s582 = sld [smem:[%s277 + %s578]]
          %s583 = scalar_lea.vmem %s319, %s582
          %v584 = vld [vmem:[%s583] sm:$0x1]
          %v585 = vsub.f32 %v581, %v584
          %s586 = sadd.s32 %s578, 1
          %s587 = sld [smem:[%s268 + %s586]]
          %s588 = scalar_lea.vmem %s319, %s587
          %v589 = vld [vmem:[%s588] sm:$0x1]
          %s590 = sld [smem:[%s277 + %s586]]
          %s591 = scalar_lea.vmem %s319, %s590
          %v592 = vld [vmem:[%s591] sm:$0x1]
          %v593 = vsub.f32 %v589, %v592
          %v594 = vmax.f32 %v585, %v593
          %s595 = sadd.s32 %s578, 2
          %s596 = sld [smem:[%s268 + %s595]]
          %s597 = scalar_lea.vmem %s319, %s596
          %v598 = vld [vmem:[%s597] sm:$0x1]
          %s599 = sld [smem:[%s277 + %s595]]
          %s600 = scalar_lea.vmem %s319, %s599
          %v601 = vld [vmem:[%s600] sm:$0x1]
          %v602 = vsub.f32 %v598, %v601
          %v603 = vmax.f32 %v594, %v602
          %s604 = sadd.s32 %s578, 3
          %s605 = sld [smem:[%s268 + %s604]]
          %s606 = scalar_lea.vmem %s319, %s605
          %v607 = vld [vmem:[%s606] sm:$0x1]
          %s608 = sld [smem:[%s277 + %s604]]
          %s609 = scalar_lea.vmem %s319, %s608
          %v610 = vld [vmem:[%s609] sm:$0x1]
          %v611 = vsub.f32 %v607, %v610
          %v612 = vmax.f32 %v603, %v611
          %s613 = sadd.s32 %s578, 4
          %s614 = sld [smem:[%s268 + %s613]]
          %s615 = scalar_lea.vmem %s319, %s614
          %v616 = vld [vmem:[%s615] sm:$0x1]
          %s617 = sld [smem:[%s277 + %s613]]
          %s618 = scalar_lea.vmem %s319, %s617
          %v619 = vld [vmem:[%s618] sm:$0x1]
          %v620 = vsub.f32 %v616, %v619
          %v621 = vmax.f32 %v612, %v620
          %s622 = sadd.s32 %s578, 5
          %s623 = sld [smem:[%s268 + %s622]]
          %s624 = scalar_lea.vmem %s319, %s623
          %v625 = vld [vmem:[%s624] sm:$0x1]
          %s626 = sld [smem:[%s277 + %s622]]
          %s627 = scalar_lea.vmem %s319, %s626
          %v628 = vld [vmem:[%s627] sm:$0x1]
          %v629 = vsub.f32 %v625, %v628
          %v630 = vmax.f32 %v621, %v629
          %s631 = sadd.s32 %s578, 6
          %s632 = sld [smem:[%s268 + %s631]]
          %s633 = scalar_lea.vmem %s319, %s632
          %v634 = vld [vmem:[%s633] sm:$0x1]
          %s635 = sld [smem:[%s277 + %s631]]
          %s636 = scalar_lea.vmem %s319, %s635
          %v637 = vld [vmem:[%s636] sm:$0x1]
          %v638 = vsub.f32 %v634, %v637
          %v639 = vmax.f32 %v630, %v638
          %s640 = sadd.s32 %s578, 7
          %s641 = sld [smem:[%s268 + %s640]]
          %s642 = scalar_lea.vmem %s319, %s641
          %v643 = vld [vmem:[%s642] sm:$0x1]
          %s644 = sld [smem:[%s277 + %s640]]
          %s645 = scalar_lea.vmem %s319, %s644
          %v646 = vld [vmem:[%s645] sm:$0x1]
          %v647 = vsub.f32 %v643, %v646
          %v648 = vmax.f32 %v639, %v647
          %s649 = sadd.s32 %s361, 4
          %s650 = smul.u32 %s649, 8
          %s651 = sld [smem:[%s268 + %s650]]
          %s652 = scalar_lea.vmem %s319, %s651
          %v653 = vld [vmem:[%s652] sm:$0x1]
          %s654 = sld [smem:[%s277 + %s650]]
          %s655 = scalar_lea.vmem %s319, %s654
          %v656 = vld [vmem:[%s655] sm:$0x1]
          %v657 = vsub.f32 %v653, %v656
          %s658 = sadd.s32 %s650, 1
          %s659 = sld [smem:[%s268 + %s658]]
          %s660 = scalar_lea.vmem %s319, %s659
          %v661 = vld [vmem:[%s660] sm:$0x1]
          %s662 = sld [smem:[%s277 + %s658]]
          %s663 = scalar_lea.vmem %s319, %s662
          %v664 = vld [vmem:[%s663] sm:$0x1]
          %v665 = vsub.f32 %v661, %v664
          %v666 = vmax.f32 %v657, %v665
          %s667 = sadd.s32 %s650, 2
          %s668 = sld [smem:[%s268 + %s667]]
          %s669 = scalar_lea.vmem %s319, %s668
          %v670 = vld [vmem:[%s669] sm:$0x1]
          %s671 = sld [smem:[%s277 + %s667]]
          %s672 = scalar_lea.vmem %s319, %s671
          %v673 = vld [vmem:[%s672] sm:$0x1]
          %v674 = vsub.f32 %v670, %v673
          %v675 = vmax.f32 %v666, %v674
          %s676 = sadd.s32 %s650, 3
          %s677 = sld [smem:[%s268 + %s676]]
          %s678 = scalar_lea.vmem %s319, %s677
          %v679 = vld [vmem:[%s678] sm:$0x1]
          %s680 = sld [smem:[%s277 + %s676]]
          %s681 = scalar_lea.vmem %s319, %s680
          %v682 = vld [vmem:[%s681] sm:$0x1]
          %v683 = vsub.f32 %v679, %v682
          %v684 = vmax.f32 %v675, %v683
          %s685 = sadd.s32 %s650, 4
          %s686 = sld [smem:[%s268 + %s685]]
          %s687 = scalar_lea.vmem %s319, %s686
          %v688 = vld [vmem:[%s687] sm:$0x1]
          %s689 = sld [smem:[%s277 + %s685]]
          %s690 = scalar_lea.vmem %s319, %s689
          %v691 = vld [vmem:[%s690] sm:$0x1]
          %v692 = vsub.f32 %v688, %v691
          %v693 = vmax.f32 %v684, %v692
          %s694 = sadd.s32 %s650, 5
          %s695 = sld [smem:[%s268 + %s694]]
          %s696 = scalar_lea.vmem %s319, %s695
          %v697 = vld [vmem:[%s696] sm:$0x1]
          %s698 = sld [smem:[%s277 + %s694]]
          %s699 = scalar_lea.vmem %s319, %s698
          %v700 = vld [vmem:[%s699] sm:$0x1]
          %v701 = vsub.f32 %v697, %v700
          %v702 = vmax.f32 %v693, %v701
          %s703 = sadd.s32 %s650, 6
          %s704 = sld [smem:[%s268 + %s703]]
          %s705 = scalar_lea.vmem %s319, %s704
          %v706 = vld [vmem:[%s705] sm:$0x1]
          %s707 = sld [smem:[%s277 + %s703]]
          %s708 = scalar_lea.vmem %s319, %s707
          %v709 = vld [vmem:[%s708] sm:$0x1]
          %v710 = vsub.f32 %v706, %v709
          %v711 = vmax.f32 %v702, %v710
          %s712 = sadd.s32 %s650, 7
          %s713 = sld [smem:[%s268 + %s712]]
          %s714 = scalar_lea.vmem %s319, %s713
          %v715 = vld [vmem:[%s714] sm:$0x1]
          %s716 = sld [smem:[%s277 + %s712]]
          %s717 = scalar_lea.vmem %s319, %s716
          %v718 = vld [vmem:[%s717] sm:$0x1]
          %v719 = vsub.f32 %v715, %v718
          %v720 = vmax.f32 %v711, %v719
          %s721 = sadd.s32 %s361, 5
          %s722 = smul.u32 %s721, 8
          %s723 = sld [smem:[%s268 + %s722]]
          %s724 = scalar_lea.vmem %s319, %s723
          %v725 = vld [vmem:[%s724] sm:$0x1]
          %s726 = sld [smem:[%s277 + %s722]]
          %s727 = scalar_lea.vmem %s319, %s726
          %v728 = vld [vmem:[%s727] sm:$0x1]
          %v729 = vsub.f32 %v725, %v728
          %s730 = sadd.s32 %s722, 1
          %s731 = sld [smem:[%s268 + %s730]]
          %s732 = scalar_lea.vmem %s319, %s731
          %v733 = vld [vmem:[%s732] sm:$0x1]
          %s734 = sld [smem:[%s277 + %s730]]
          %s735 = scalar_lea.vmem %s319, %s734
          %v736 = vld [vmem:[%s735] sm:$0x1]
          %v737 = vsub.f32 %v733, %v736
          %v738 = vmax.f32 %v729, %v737
          %s739 = sadd.s32 %s722, 2
          %s740 = sld [smem:[%s268 + %s739]]
          %s741 = scalar_lea.vmem %s319, %s740
          %v742 = vld [vmem:[%s741] sm:$0x1]
          %s743 = sld [smem:[%s277 + %s739]]
          %s744 = scalar_lea.vmem %s319, %s743
          %v745 = vld [vmem:[%s744] sm:$0x1]
          %v746 = vsub.f32 %v742, %v745
          %v747 = vmax.f32 %v738, %v746
          %s748 = sadd.s32 %s722, 3
          %s749 = sld [smem:[%s268 + %s748]]
          %s750 = scalar_lea.vmem %s319, %s749
          %v751 = vld [vmem:[%s750] sm:$0x1]
          %s752 = sld [smem:[%s277 + %s748]]
          %s753 = scalar_lea.vmem %s319, %s752
          %v754 = vld [vmem:[%s753] sm:$0x1]
          %v755 = vsub.f32 %v751, %v754
          %v756 = vmax.f32 %v747, %v755
          %s757 = sadd.s32 %s722, 4
          %s758 = sld [smem:[%s268 + %s757]]
          %s759 = scalar_lea.vmem %s319, %s758
          %v760 = vld [vmem:[%s759] sm:$0x1]
          %s761 = sld [smem:[%s277 + %s757]]
          %s762 = scalar_lea.vmem %s319, %s761
          %v763 = vld [vmem:[%s762] sm:$0x1]
          %v764 = vsub.f32 %v760, %v763
          %v765 = vmax.f32 %v756, %v764
          %s766 = sadd.s32 %s722, 5
          %s767 = sld [smem:[%s268 + %s766]]
          %s768 = scalar_lea.vmem %s319, %s767
          %v769 = vld [vmem:[%s768] sm:$0x1]
          %s770 = sld [smem:[%s277 + %s766]]
          %s771 = scalar_lea.vmem %s319, %s770
          %v772 = vld [vmem:[%s771] sm:$0x1]
          %v773 = vsub.f32 %v769, %v772
          %v774 = vmax.f32 %v765, %v773
          %s775 = sadd.s32 %s722, 6
          %s776 = sld [smem:[%s268 + %s775]]
          %s777 = scalar_lea.vmem %s319, %s776
          %v778 = vld [vmem:[%s777] sm:$0x1]
          %s779 = sld [smem:[%s277 + %s775]]
          %s780 = scalar_lea.vmem %s319, %s779
          %v781 = vld [vmem:[%s780] sm:$0x1]
          %v782 = vsub.f32 %v778, %v781
          %v783 = vmax.f32 %v774, %v782
          %s784 = sadd.s32 %s722, 7
          %s785 = sld [smem:[%s268 + %s784]]
          %s786 = scalar_lea.vmem %s319, %s785
          %v787 = vld [vmem:[%s786] sm:$0x1]
          %s788 = sld [smem:[%s277 + %s784]]
          %s789 = scalar_lea.vmem %s319, %s788
          %v790 = vld [vmem:[%s789] sm:$0x1]
          %v791 = vsub.f32 %v787, %v790
          %v792 = vmax.f32 %v783, %v791
          %s793 = sadd.s32 %s361, 6
          %s794 = smul.u32 %s793, 8
          %s795 = sld [smem:[%s268 + %s794]]
          %s796 = scalar_lea.vmem %s319, %s795
          %v797 = vld [vmem:[%s796] sm:$0x1]
          %s798 = sld [smem:[%s277 + %s794]]
          %s799 = scalar_lea.vmem %s319, %s798
          %v800 = vld [vmem:[%s799] sm:$0x1]
          %v801 = vsub.f32 %v797, %v800
          %s802 = sadd.s32 %s794, 1
          %s803 = sld [smem:[%s268 + %s802]]
          %s804 = scalar_lea.vmem %s319, %s803
          %v805 = vld [vmem:[%s804] sm:$0x1]
          %s806 = sld [smem:[%s277 + %s802]]
          %s807 = scalar_lea.vmem %s319, %s806
          %v808 = vld [vmem:[%s807] sm:$0x1]
          %v809 = vsub.f32 %v805, %v808
          %v810 = vmax.f32 %v801, %v809
          %s811 = sadd.s32 %s794, 2
          %s812 = sld [smem:[%s268 + %s811]]
          %s813 = scalar_lea.vmem %s319, %s812
          %v814 = vld [vmem:[%s813] sm:$0x1]
          %s815 = sld [smem:[%s277 + %s811]]
          %s816 = scalar_lea.vmem %s319, %s815
          %v817 = vld [vmem:[%s816] sm:$0x1]
          %v818 = vsub.f32 %v814, %v817
          %v819 = vmax.f32 %v810, %v818
          %s820 = sadd.s32 %s794, 3
          %s821 = sld [smem:[%s268 + %s820]]
          %s822 = scalar_lea.vmem %s319, %s821
          %v823 = vld [vmem:[%s822] sm:$0x1]
          %s824 = sld [smem:[%s277 + %s820]]
          %s825 = scalar_lea.vmem %s319, %s824
          %v826 = vld [vmem:[%s825] sm:$0x1]
          %v827 = vsub.f32 %v823, %v826
          %v828 = vmax.f32 %v819, %v827
          %s829 = sadd.s32 %s794, 4
          %s830 = sld [smem:[%s268 + %s829]]
          %s831 = scalar_lea.vmem %s319, %s830
          %v832 = vld [vmem:[%s831] sm:$0x1]
          %s833 = sld [smem:[%s277 + %s829]]
          %s834 = scalar_lea.vmem %s319, %s833
          %v835 = vld [vmem:[%s834] sm:$0x1]
          %v836 = vsub.f32 %v832, %v835
          %v837 = vmax.f32 %v828, %v836
          %s838 = sadd.s32 %s794, 5
          %s839 = sld [smem:[%s268 + %s838]]
          %s840 = scalar_lea.vmem %s319, %s839
          %v841 = vld [vmem:[%s840] sm:$0x1]
          %s842 = sld [smem:[%s277 + %s838]]
          %s843 = scalar_lea.vmem %s319, %s842
          %v844 = vld [vmem:[%s843] sm:$0x1]
          %v845 = vsub.f32 %v841, %v844
          %v846 = vmax.f32 %v837, %v845
          %s847 = sadd.s32 %s794, 6
          %s848 = sld [smem:[%s268 + %s847]]
          %s849 = scalar_lea.vmem %s319, %s848
          %v850 = vld [vmem:[%s849] sm:$0x1]
          %s851 = sld [smem:[%s277 + %s847]]
          %s852 = scalar_lea.vmem %s319, %s851
          %v853 = vld [vmem:[%s852] sm:$0x1]
          %v854 = vsub.f32 %v850, %v853
          %v855 = vmax.f32 %v846, %v854
          %s856 = sadd.s32 %s794, 7
          %s857 = sld [smem:[%s268 + %s856]]
          %s858 = scalar_lea.vmem %s319, %s857
          %v859 = vld [vmem:[%s858] sm:$0x1]
          %s860 = sld [smem:[%s277 + %s856]]
          %s861 = scalar_lea.vmem %s319, %s860
          %v862 = vld [vmem:[%s861] sm:$0x1]
          %v863 = vsub.f32 %v859, %v862
          %v864 = vmax.f32 %v855, %v863
          %s865 = sadd.s32 %s361, 7
          %s866 = smul.u32 %s865, 8
          %s867 = sld [smem:[%s268 + %s866]]
          %s868 = scalar_lea.vmem %s319, %s867
          %v869 = vld [vmem:[%s868] sm:$0x1]
          %s870 = sld [smem:[%s277 + %s866]]
          %s871 = scalar_lea.vmem %s319, %s870
          %v872 = vld [vmem:[%s871] sm:$0x1]
          %v873 = vsub.f32 %v869, %v872
          %s874 = sadd.s32 %s866, 1
          %s875 = sld [smem:[%s268 + %s874]]
          %s876 = scalar_lea.vmem %s319, %s875
          %v877 = vld [vmem:[%s876] sm:$0x1]
          %s878 = sld [smem:[%s277 + %s874]]
          %s879 = scalar_lea.vmem %s319, %s878
          %v880 = vld [vmem:[%s879] sm:$0x1]
          %v881 = vsub.f32 %v877, %v880
          %v882 = vmax.f32 %v873, %v881
          %s883 = sadd.s32 %s866, 2
          %s884 = sld [smem:[%s268 + %s883]]
          %s885 = scalar_lea.vmem %s319, %s884
          %v886 = vld [vmem:[%s885] sm:$0x1]
          %s887 = sld [smem:[%s277 + %s883]]
          %s888 = scalar_lea.vmem %s319, %s887
          %v889 = vld [vmem:[%s888] sm:$0x1]
          %v890 = vsub.f32 %v886, %v889
          %v891 = vmax.f32 %v882, %v890
          %s892 = sadd.s32 %s866, 3
          %s893 = sld [smem:[%s268 + %s892]]
          %s894 = scalar_lea.vmem %s319, %s893
          %v895 = vld [vmem:[%s894] sm:$0x1]
          %s896 = sld [smem:[%s277 + %s892]]
          %s897 = scalar_lea.vmem %s319, %s896
          %v898 = vld [vmem:[%s897] sm:$0x1]
          %v899 = vsub.f32 %v895, %v898
          %v900 = vmax.f32 %v891, %v899
          %s901 = sadd.s32 %s866, 4
          %s902 = sld [smem:[%s268 + %s901]]
          %s903 = scalar_lea.vmem %s319, %s902
          %v904 = vld [vmem:[%s903] sm:$0x1]
          %s905 = sld [smem:[%s277 + %s901]]
          %s906 = scalar_lea.vmem %s319, %s905
          %v907 = vld [vmem:[%s906] sm:$0x1]
          %v908 = vsub.f32 %v904, %v907
          %v909 = vmax.f32 %v900, %v908
          %s910 = sadd.s32 %s866, 5
          %s911 = sld [smem:[%s268 + %s910]]
          %s912 = scalar_lea.vmem %s319, %s911
          %v913 = vld [vmem:[%s912] sm:$0x1]
          %s914 = sld [smem:[%s277 + %s910]]
          %s915 = scalar_lea.vmem %s319, %s914
          %v916 = vld [vmem:[%s915] sm:$0x1]
          %v917 = vsub.f32 %v913, %v916
          %v918 = vmax.f32 %v909, %v917
          %s919 = sadd.s32 %s866, 6
          %s920 = sld [smem:[%s268 + %s919]]
          %s921 = scalar_lea.vmem %s319, %s920
          %v922 = vld [vmem:[%s921] sm:$0x1]
          %s923 = sld [smem:[%s277 + %s919]]
          %s924 = scalar_lea.vmem %s319, %s923
          %v925 = vld [vmem:[%s924] sm:$0x1]
          %v926 = vsub.f32 %v922, %v925
          %v927 = vmax.f32 %v918, %v926
          %s928 = sadd.s32 %s866, 7
          %s929 = sld [smem:[%s268 + %s928]]
          %s930 = scalar_lea.vmem %s319, %s929
          %v931 = vld [vmem:[%s930] sm:$0x1]
          %s932 = sld [smem:[%s277 + %s928]]
          %s933 = scalar_lea.vmem %s319, %s932
          %v934 = vld [vmem:[%s933] sm:$0x1]
          %v935 = vsub.f32 %v931, %v934
          %v936 = vmax.f32 %v927, %v935
          %v938 = vrot.slane %v504, 7
          %v941 = vrot.slane %v576, 6
          %v944 = vrot.slane %v648, 5
          %v947 = vrot.slane %v720, 4
          %v950 = vrot.slane %v792, 3
          %v953 = vrot.slane %v864, 2
          %v956 = vrot.slane %v936, 1
          %vm958 = vcmask 1040384
          %v959 = vsel %vm958, %v432, %v938
          %vm960 = vcmask 1041408
          %v961 = vsel %vm960, %v959, %v941
          %vm962 = vcmask 1042432
          %v963 = vsel %vm962, %v961, %v944
          %vm964 = vcmask 1043456
          %v965 = vsel %vm964, %v963, %v947
          %vm966 = vcmask 1044480
          %v967 = vsel %vm966, %v965, %v950
          %vm968 = vcmask 1045504
          %v969 = vsel %vm968, %v967, %v953
          %vm970 = vcmask 1046528
          %v971 = vsel %vm970, %v969, %v956
          %973 = vrot.lane.b32.xlu0 %v971, 4
          %v974 = vpop.permute.xlu0 %973
          %s976 = scalar_lea.vmem [#allocation2], %s361
          %vm977 = vcmask 64544
          %978 = vst.msk [vmem:[%s976] sm:$0xff] %vm977, %v974
        $region53: #{tpu_custom_call.1} parent=39 // loop_footer
          %s360 = sadd.s32 1, %s356
        $region54: #{tpu_custom_call.1} parent=39 // loop_footer_branch
          %355 = sbr.rel target = $region50
        $region55: #{tpu_custom_call.1} parent=39 // loop_exit
          _
        %v979 = vld [vmem:[%s3] sm:$0xff]
        %v980 = vld [vmem:[#allocation2] sm:$0xff]
        %v981 = vld [vmem:[#allocation2 + $0x8] sm:$0xff]
        %v982 = vld [vmem:[#allocation2 + $0x10] sm:$0xff]
        %v983 = vld [vmem:[#allocation2 + $0x18] sm:$0xff]
        %v984 = vld [vmem:[#allocation2 + $0x20] sm:$0xff]
        %v985 = vld [vmem:[#allocation2 + $0x28] sm:$0xff]
        %v986 = vld [vmem:[#allocation2 + $0x30] sm:$0xff]
        %v987 = vld [vmem:[#allocation2 + $0x38] sm:$0xff]
        %v988 = vld [vmem:[#allocation2 + $0x40] sm:$0xff]
        %v989 = vld [vmem:[#allocation2 + $0x48] sm:$0xff]
        %v990 = vld [vmem:[#allocation2 + $0x50] sm:$0xff]
        %v991 = vld [vmem:[#allocation2 + $0x58] sm:$0xff]
        %v992 = vld [vmem:[#allocation2 + $0x60] sm:$0xff]
        %v993 = vld [vmem:[#allocation2 + $0x68] sm:$0xff]
        %v994 = vld [vmem:[#allocation2 + $0x70] sm:$0xff]
        %v995 = vld [vmem:[#allocation2 + $0x78] sm:$0xff]
        %v996 = vld [vmem:[%s4] sm:$0xff]
        %998 = vset.pattern.permute.xlu0 0
        %999 = vperm.xlu0 %998, %v996
        %v1000 = vpop.permute.xlu0 %999
        %vm1002 = vcmask 64512
        %v1004 = vsel %vm1002, %v979, 0
        %v1007 = vsel %vm1002, %v980, 0
        %v1010 = vsel %vm1002, %v981, 0
        %v1013 = vsel %vm1002, %v982, 0
        %v1016 = vsel %vm1002, %v983, 0
        %v1019 = vsel %vm1002, %v984, 0
        %v1022 = vsel %vm1002, %v985, 0
        %v1025 = vsel %vm1002, %v986, 0
        %v1028 = vsel %vm1002, %v987, 0
        %v1031 = vsel %vm1002, %v988, 0
        %v1034 = vsel %vm1002, %v989, 0
        %v1037 = vsel %vm1002, %v990, 0
        %v1040 = vsel %vm1002, %v991, 0
        %v1043 = vsel %vm1002, %v992, 0
        %v1046 = vsel %vm1002, %v993, 0
        %v1049 = vsel %vm1002, %v994, 0
        %v1052 = vsel %vm1002, %v995, 0
        %1054 = vmatprep.subr.mxu0 0.0
        %1055 = vmatpush1.xpose.msra.mxu0 %v1052
        %1056 = vmatprep.subr.mxu0 0.0
        %1057 = vmatpush1.xpose.msra.mxu0 %v1049
        %1058 = vmatprep.subr.mxu0 0.0
        %1059 = vmatpush1.xpose.msra.mxu0 %v1046
        %1060 = vmatprep.subr.mxu0 0.0
        %1061 = vmatpush1.xpose.msra.mxu0 %v1043
        %1062 = vmatprep.subr.mxu0 0.0
        %1063 = vmatpush1.xpose.msra.mxu0 %v1040
        %1064 = vmatprep.subr.mxu0 0.0
        %1065 = vmatpush1.xpose.msra.mxu0 %v1037
        %1066 = vmatprep.subr.mxu0 0.0
        %1067 = vmatpush1.xpose.msra.mxu0 %v1034
        %1068 = vmatprep.subr.mxu0 0.0
        %1069 = vmatpush1.xpose.msra.mxu0 %v1031
        %1070 = vmatprep.subr.mxu0 0.0
        %1071 = vmatpush1.xpose.msra.mxu0 %v1028
        %1072 = vmatprep.subr.mxu0 0.0
        %1073 = vmatpush1.xpose.msra.mxu0 %v1025
        %1074 = vmatprep.subr.mxu0 0.0
        %1075 = vmatpush1.xpose.msra.mxu0 %v1022
        %1076 = vmatprep.subr.mxu0 0.0
        %1077 = vmatpush1.xpose.msra.mxu0 %v1019
        %1078 = vmatprep.subr.mxu0 0.0
        %1079 = vmatpush1.xpose.msra.mxu0 %v1016
        %1080 = vmatprep.subr.mxu0 0.0
        %1081 = vmatpush1.xpose.msra.mxu0 %v1013
        %1082 = vmatprep.subr.mxu0 0.0
        %1083 = vmatpush1.xpose.msra.mxu0 %v1010
        %1084 = vmatprep.subr.mxu0 0.0
        %1085 = vmatpush1.xpose.msra.mxu0 %v1007
        %1086 = vmatprep.subr.mxu0 0.0
        %1087 = vmatpush2.xpose.msra.mxu0 0.0
        %1088 = vmatprep.subr.mxu0 0.0
        %1089 = vmatpush2.xpose.msra.mxu0 0.0
        %1090 = vmatprep.subr.mxu0 0.0
        %1091 = vmatpush2.xpose.msra.mxu0 0.0
        %1092 = vmatprep.subr.mxu0 0.0
        %1093 = vmatpush2.xpose.msra.mxu0 0.0
        %1094 = vmatprep.subr.mxu0 0.0
        %1095 = vmatpush2.xpose.msra.mxu0 0.0
        %1096 = vmatprep.subr.mxu0 0.0
        %1097 = vmatpush2.xpose.msra.mxu0 0.0
        %1098 = vmatprep.subr.mxu0 0.0
        %1099 = vmatpush2.xpose.msra.mxu0 0.0
        %1100 = vmatprep.subr.mxu0 0.0
        %1101 = vmatpush2.xpose.msra.mxu0 0.0
        %1102 = vmatprep.subr.mxu0 0.0
        %1103 = vmatpush2.xpose.msra.mxu0 0.0
        %1104 = vmatprep.subr.mxu0 0.0
        %1105 = vmatpush2.xpose.msra.mxu0 0.0
        %1106 = vmatprep.subr.mxu0 0.0
        %1107 = vmatpush2.xpose.msra.mxu0 0.0
        %1108 = vmatprep.subr.mxu0 0.0
        %1109 = vmatpush2.xpose.msra.mxu0 0.0
        %1110 = vmatprep.subr.mxu0 0.0
        %1111 = vmatpush2.xpose.msra.mxu0 0.0
        %1112 = vmatprep.subr.mxu0 0.0
        %1113 = vmatpush2.xpose.msra.mxu0 0.0
        %1114 = vmatprep.subr.mxu0 0.0
        %1115 = vmatpush2.xpose.msra.mxu0 0.0
        %1116 = vmatprep.subr.mxu0 0.0
        %1117 = vmatpush2.xpose.msra.mxu0 0.0
        %1118 = vmatprep.mubr.f32.mxu0 0.0
        %1119 = vmatmul.mubr.f32.gmra.mxu0 %v1004
        %v1120 = vpop.f32.mrf.mxu0
        %v1121 = vadd.f32 %v1000, %v1120
        %v1122 = vpop.f32.mrf.mxu0
        %1123 = vdwg.mxu0
        %v1124 = vmax.f32 %v1121, 0.0
        %1125 = vst [vmem:[%s314] sm:$0xff] %v1124
        %s1126 = sand.u32 %s171, 1
        %s1127 = scalar_lea.sflag [#allocation4], %s1126
        %s1128 = sand.u32 %s171, 1
        %s1129 = smul.addr %s1128, 8
        %s1130 = scalar_lea.vmem [#allocation8], %s1129
        // Predicated region
        $region56: #{tpu_custom_call.1} parent=39 // pred_check
          %p1131 = pneg %p181
        $region57: #{tpu_custom_call.1} parent=39 // pred_check_branch
          %1133 = sbr.rel (%p1131) target = $region59
        $region58: #{tpu_custom_call.1} parent=39 // pred_region
          %s1135 = ssub.s32 128, 128
          %1136 = vsyncadd %s1127, %s1135
          %s1137 = sadd.s32 %s30, %s29
          %s1138 = smul.addr %s1137, 128
          %s1139 = scalar_lea.hbm %s5, %s1138
          %s1141 = sshll.u32 %s1130, 4
          %s1142 = int_to_ptr.vmem [resolvable:$true] %s1141
          %1144 = dma.vmem_to_hbm [thread:$0]  %s1142, 128, %s1139, %s1127
        $region59: #{tpu_custom_call.1} parent=39 // pred_fallthru
          _
      $region40: #{tpu_custom_call.1} parent=5 // pred_fallthru
        _
      %p1145 = scmp.le.s32.totalorder 2, %s20
      // Predicated region
      $region60: #{tpu_custom_call.1} parent=5 // pred_check
        %p1146 = pneg %p1145
      $region61: #{tpu_custom_call.1} parent=5 // pred_check_branch
        %1148 = sbr.rel (%p1146) target = $region63
      $region62: #{tpu_custom_call.1} parent=5 // pred_region
        %s1149 = ssub.s32 %s20, 2
        // Predicated region
        $region64: #{tpu_custom_call.1} parent=62 // pred_check
          %p1150 = pneg %p187
        $region65: #{tpu_custom_call.1} parent=62 // pred_check_branch
          %1152 = sbr.rel (%p1150) target = $region67
        $region66: #{tpu_custom_call.1} parent=62 // pred_region
          %s1153 = sand.u32 %s172, 1
          %s1154 = scalar_lea.sflag [#allocation4], %s1153
          %s1155 = sand.u32 %s172, 1
          %s1156 = smul.addr %s1155, 8
          %s1157 = scalar_lea.vmem [#allocation8], %s1156
          %1158 = dma.done %s1154, 128
        $region67: #{tpu_custom_call.1} parent=62 // pred_fallthru
          _
      $region63: #{tpu_custom_call.1} parent=5 // pred_fallthru
        _
    $region6: #{tpu_custom_call.1} parent=1 // loop_footer
      %s24 = sadd.s32 1, %s20
    $region7: #{tpu_custom_call.1} parent=1 // loop_footer_branch
      %19 = sbr.rel target = $region3
    $region8: #{tpu_custom_call.1} parent=1 // loop_exit
      _
    %1159 = vsyncpa [#allocation4], 1
    %s1160 = scalar_lea.sflag [#allocation4], 1
    %1161 = vsyncpa %s1160, 1
    %1162 = vsyncpa [#allocation5], 1
    %s1163 = scalar_lea.sflag [#allocation5], 1
    %1164 = vsyncpa %s1163, 1
    %1165 = vsyncpa [#allocation7], 1
    %s1166 = scalar_lea.sflag [#allocation7], 1
    %1167 = vsyncpa %s1166, 1

</llo_original>
